<compile_context>
chip_gen: v7x
topology: tpu7x:2x2x1
jax: 0.10.0
libtpu: 0.0.40
codegen_flags: <defaults>
</compile_context>

<pallas_src>
import functools
import math

import jax
import jax.numpy as jnp
from jax.experimental import pallas as pl
from jax.experimental.pallas import tpu as pltpu


NEG_BIAS = -1e9
LN_EPS = 1e-5
VMEM_LIMIT_BYTES = 64 * 1024 * 1024   # <= physical VMEM on v5e / v6e / v7x
Q_BLOCK_TARGET = 512                  # target query rows per grid step


# ----------------------------------------------------------------------------
# Small helpers
# ----------------------------------------------------------------------------

def _row_block(n, target=Q_BLOCK_TARGET):
    """Largest multiple-of-8 divisor of n that is <= target (else the full extent)."""
    if n <= target:
        return n
    for cand in range(target - target % 8, 7, -8):
        if n % cand == 0:
            return cand
    return n


def _const_spec(shape, grid_rank):
    """BlockSpec selecting the whole array (constant index_map over the grid).
    (For very large weights add pipeline_mode=pl.Buffered(1): constant blocks never
    need double-buffering.)"""
    n = len(shape)
    if grid_rank == 1:
        return pl.BlockSpec(shape, lambda i, _n=n: (0,) * _n)
    return pl.BlockSpec(shape, lambda i, j, _n=n: (0,) * _n)


def _layer_norm(x, g, b):
    mu = jnp.mean(x, axis=-1, keepdims=True)
    var = jnp.mean(jnp.square(x - mu), axis=-1, keepdims=True)
    return (x - mu) * jax.lax.rsqrt(var + LN_EPS) * g + b


def _residual_ln_ffn(x_res, attn_proj, bo, g0, be0, w1, b1, w2, b2, g1, be1):
    """dropout(=id) -> +residual -> LN0 -> fc1/relu/fc2 -> +residual -> LN1 (all f32
    elementwise; only the matmul operands are cast to bf16)."""
    x = _layer_norm(x_res + attn_proj + bo, g0, be0)
    h = jnp.dot(x.astype(jnp.bfloat16), w1, preferred_element_type=jnp.float32) + b1
    h = jnp.maximum(h, 0.0)
    y = jnp.dot(h.astype(jnp.bfloat16), w2, preferred_element_type=jnp.float32) + b2
    return _layer_norm(x + y, g1, be1)


def _mha_into(oacc_ref, q, k, v, bias, num_heads, head_dim, need_weights, approx_recip):
    """q:(tq,E)  k,v:(Tk,E)  bias:(1,Tk), all f32 (scale folded into q).
    Writes each head's context into its lane range of oacc_ref (tq,E) f32 so the caller
    can do a single K=E output projection.  Returns head-summed softmax weights or None."""
    tq, tk = q.shape[0], k.shape[0]
    bias_full = jnp.broadcast_to(bias, (tq, tk))   # hoisted: one broadcast for all heads
    q16 = q.astype(jnp.bfloat16)
    k16 = k.astype(jnp.bfloat16)
    v16 = v.astype(jnp.bfloat16)
    wsum = None
    for h in range(num_heads):                     # static unroll; all heads per grid step
        sl = slice(h * head_dim, (h + 1) * head_dim)
        s = jax.lax.dot_general(q16[:, sl], k16[:, sl], (((1,), (1,)), ((), ())),
                                preferred_element_type=jnp.float32)       # (tq, tk)
        s = s + bias_full
        m = jnp.max(s, axis=-1, keepdims=True)
        p = jnp.exp(s - m)
        denom = jnp.sum(p, axis=-1, keepdims=True)
        inv = pl.reciprocal(denom, approx=True) if approx_recip else 1.0 / denom
        p = p * inv
        oacc_ref[:, sl] = jnp.dot(p.astype(jnp.bfloat16), v16[:, sl],
                                  preferred_element_type=jnp.float32)     # (tq, hd)
        if need_weights:
            wsum = p if wsum is None else wsum + p
    return wsum


# ----------------------------------------------------------------------------
# Fused per-layer Pallas kernels
# ----------------------------------------------------------------------------

def self_attn_layer_kernel(num_heads, head_dim,
                           xq_ref, xf_ref, bias_ref,
                           wq_ref, bq_ref, wkv_ref, bkv_ref, wo_ref, bo_ref,
                           g0_ref, be0_ref, w1_ref, b1_ref, w2_ref, b2_ref,
                           g1_ref, be1_ref,
                           o_ref, oacc_ref):
    e = num_heads * head_dim
    xq = xq_ref[0].astype(jnp.float32)                                  # (tq, E) residual
    q = jnp.dot(xq.astype(jnp.bfloat16), wq_ref[...],
                preferred_element_type=jnp.float32) + bq_ref[...]       # (tq, E)
    kv = jnp.dot(xf_ref[0].astype(jnp.bfloat16), wkv_ref[...],
                 preferred_element_type=jnp.float32) + bkv_ref[...]     # (T, 2E)
    _mha_into(oacc_ref, q, kv[:, :e], kv[:, e:], bias_ref[0],
              num_heads, head_dim, need_weights=False, approx_recip=True)
    attn = jnp.dot(oacc_ref[...].astype(jnp.bfloat16), wo_ref[...],
                   preferred_element_type=jnp.float32)                  # single K=E matmul
    y = _residual_ln_ffn(xq, attn, bo_ref[...], g0_ref[...], be0_ref[...],
                         w1_ref[...], b1_ref[...], w2_ref[...], b2_ref[...],
                         g1_ref[...], be1_ref[...])
    o_ref[0] = y.astype(o_ref.dtype)


def cross_attn_layer_kernel(num_heads, head_dim,
                            xq_ref, xk_ref, xv_ref, bias_ref,
                            w_in_ref, b_in_ref, wo_ref, bo_ref,
                            g0_ref, be0_ref, w1_ref, b1_ref, w2_ref, b2_ref,
                            g1_ref, be1_ref,
                            o_ref, attnw_ref, oacc_ref):
    xq = xq_ref[0].astype(jnp.float32)                                  # (tq, E) residual
    q = jnp.dot(xq.astype(jnp.bfloat16), w_in_ref[0],
                preferred_element_type=jnp.float32) + b_in_ref[0]
    k = jnp.dot(xk_ref[0].astype(jnp.bfloat16), w_in_ref[1],
                preferred_element_type=jnp.float32) + b_in_ref[1]
    v = jnp.dot(xv_ref[0].astype(jnp.bfloat16), w_in_ref[2],
                preferred_element_type=jnp.float32) + b_in_ref[2]
    wsum = _mha_into(oacc_ref, q, k, v, bias_ref[0],
                     num_heads, head_dim, need_weights=True, approx_recip=False)
    attn = jnp.dot(oacc_ref[...].astype(jnp.bfloat16), wo_ref[...],
                   preferred_element_type=jnp.float32)
    y = _residual_ln_ffn(xq, attn, bo_ref[...], g0_ref[...], be0_ref[...],
                         w1_ref[...], b1_ref[...], w2_ref[...], b2_ref[...],
                         g1_ref[...], be1_ref[...])
    o_ref[0] = y.astype(o_ref.dtype)
    attnw_ref[0] = (wsum * (1.0 / num_heads)).astype(attnw_ref.dtype)


def layer_norm_kernel(x_ref, g_ref, b_ref, o_ref):
    x = x_ref[...].astype(jnp.float32)
    o_ref[...] = _layer_norm(x, g_ref[...], b_ref[...]).astype(o_ref.dtype)


# ----------------------------------------------------------------------------
# pallas_call wrappers
# ----------------------------------------------------------------------------

def self_attn_layer(x, bias, p, num_heads):
    """x: (B, T, E) batch-major, bias: (B, 1, T) additive key-padding bias."""
    b, t, e = x.shape
    hd = e // num_heads
    qblk = _row_block(t)
    args = (x, x, bias,
            p["wq"], p["bq"], p["wkv"], p["bkv"], p["wo"], p["bo"],
            p["ln0_g"], p["ln0_b"], p["fc1_w"], p["fc1_b"],
            p["fc2_w"], p["fc2_b"], p["ln1_g"], p["ln1_b"])
    in_specs = [pl.BlockSpec((1, qblk, e), lambda bi, qi: (bi, qi, 0)),   # query tile
                pl.BlockSpec((1, t, e), lambda bi, qi: (bi, 0, 0)),       # full K/V source
                pl.BlockSpec((1, 1, t), lambda bi, qi: (bi, 0, 0))]       # key-padding bias
    in_specs += [_const_spec(a.shape, 2) for a in args[3:]]
    return pl.pallas_call(
        functools.partial(self_attn_layer_kernel, num_heads, hd),
        out_shape=jax.ShapeDtypeStruct((b, t, e), x.dtype),
        grid=(b, t // qblk),
        in_specs=in_specs,
        out_specs=pl.BlockSpec((1, qblk, e), lambda bi, qi: (bi, qi, 0)),
        scratch_shapes=[pltpu.VMEM((qblk, e), jnp.float32)],
        compiler_params=pltpu.CompilerParams(
            dimension_semantics=("parallel", "parallel"),
            vmem_limit_bytes=VMEM_LIMIT_BYTES),
    )(*args)


def cross_attn_layer(xq, xk, xv, bias, p, num_heads):
    """xq: (B, Tq, E), xk/xv: (B, Tk, E), bias: (B, 1, Tk)."""
    b, tq, e = xq.shape
    tk = xk.shape[1]
    hd = e // num_heads
    qblk = _row_block(tq)
    args = (xq, xk, xv, bias,
            p["w_in"], p["b_in"], p["wo"], p["bo"],
            p["ln0_g"], p["ln0_b"], p["fc1_w"], p["fc1_b"],
            p["fc2_w"], p["fc2_b"], p["ln1_g"], p["ln1_b"])
    in_specs = [pl.BlockSpec((1, qblk, e), lambda bi, qi: (bi, qi, 0)),
                pl.BlockSpec((1, tk, e), lambda bi, qi: (bi, 0, 0)),
                pl.BlockSpec((1, tk, e), lambda bi, qi: (bi, 0, 0)),
                pl.BlockSpec((1, 1, tk), lambda bi, qi: (bi, 0, 0))]
    in_specs += [_const_spec(a.shape, 2) for a in args[4:]]
    return pl.pallas_call(
        functools.partial(cross_attn_layer_kernel, num_heads, hd),
        out_shape=(jax.ShapeDtypeStruct((b, tq, e), xq.dtype),
                   jax.ShapeDtypeStruct((b, tq, tk), jnp.float32)),
        grid=(b, tq // qblk),
        in_specs=in_specs,
        out_specs=(pl.BlockSpec((1, qblk, e), lambda bi, qi: (bi, qi, 0)),
                   pl.BlockSpec((1, qblk, tk), lambda bi, qi: (bi, qi, 0))),
        scratch_shapes=[pltpu.VMEM((qblk, e), jnp.float32)],
        compiler_params=pltpu.CompilerParams(
            dimension_semantics=("parallel", "parallel"),
            vmem_limit_bytes=VMEM_LIMIT_BYTES),
    )(*args)


def pallas_layer_norm(x2d, g, b):
    n, e = x2d.shape
    br = _row_block(n)
    args = (x2d, g.reshape(1, e), b.reshape(1, e))
    return pl.pallas_call(
        layer_norm_kernel,
        out_shape=jax.ShapeDtypeStruct((n, e), x2d.dtype),
        grid=(n // br,),
        in_specs=[pl.BlockSpec((br, e), lambda i: (i, 0)),
                  _const_spec((1, e), 1), _const_spec((1, e), 1)],
        out_specs=pl.BlockSpec((br, e), lambda i: (i, 0)),
        compiler_params=pltpu.CompilerParams(
            dimension_semantics=("parallel",),
            vmem_limit_bytes=VMEM_LIMIT_BYTES),
    )(*args)


# ----------------------------------------------------------------------------
# TransformerDecoder forward (module semantics, eval mode)
# ----------------------------------------------------------------------------

def sinusoidal_positional_embedding(seq_len, embed_dim, padding_idx=0):
    """fairseq-style sinusoidal table; positions = padding_idx+1 .. padding_idx+seq_len."""
    # TODO(synk): make_positions' exact-zero "padding symbol" detection on float inputs is
    #             not replicated; positions are always 1..T (identical for non-zero inputs).
    half = embed_dim // 2
    freq = math.log(10000.0) / max(half - 1, 1)
    inv = jnp.exp(jnp.arange(half, dtype=jnp.float32) * -freq)
    pos = jnp.arange(padding_idx + 1, padding_idx + 1 + seq_len, dtype=jnp.float32)
    ang = pos[:, None] * inv[None, :]
    emb = jnp.concatenate([jnp.sin(ang), jnp.cos(ang)], axis=1)
    if embed_dim % 2 == 1:
        emb = jnp.concatenate([emb, jnp.zeros((seq_len, 1), jnp.float32)], axis=1)
    return emb                                                # (seq_len, embed_dim)


def _mask_to_bias(mask, batch, klen):
    # TODO(synk): the reference passes the same key_padding_mask to self- and cross-attn;
    #             when the mask length differs from this attention's key length (Tq != Tk)
    #             PyTorch would error — here it is simply not applied.
    if mask is None or mask.shape[1] != klen:
        return jnp.zeros((batch, 1, klen), jnp.float32)
    return jnp.where(mask[:, None, :], NEG_BIAS, 0.0).astype(jnp.float32)


def transformer_decoder_forward(params, x_in, x_in_k, x_in_v, key_padding_mask=None,
                                *, num_heads, layers, position_embedding=True):
    """Inputs are time-major (T, B, E) like the PyTorch module.  Returns
    (x, intermediates, attn_intermediates)."""
    t, bsz, e = x_in.shape
    tk = x_in_k.shape[0]
    embed_scale = math.sqrt(e)

    # Embedding scale + positional embedding (+ embed_dropout == identity at eval).
    x = embed_scale * x_in
    x_k = embed_scale * x_in_k
    x_v = embed_scale * x_in_v
    if position_embedding:
        x = x + sinusoidal_positional_embedding(t, e)[:, None, :]
        pos_k = sinusoidal_positional_embedding(tk, e)[:, None, :]
        x_k = x_k + pos_k
        x_v = x_v + pos_k

    # Batch-major layout for the fused per-layer kernels.
    xb = x.transpose(1, 0, 2)
    xkb = x_k.transpose(1, 0, 2)
    xvb = x_v.transpose(1, 0, 2)

    bias_self = _mask_to_bias(key_padding_mask, bsz, t)
    bias_cross = _mask_to_bias(key_padding_mask, bsz, tk)

    intermediates_b = []
    attn_intermediates = []
    for li in range(layers):
        xb = self_attn_layer(xb, bias_self, params["self"][li], num_heads)
        xb, attn_w = cross_attn_layer(xb, xkb, xvb, bias_cross,
                                      params["cross"][li], num_heads)
        intermediates_b.append(xb)                 # stay batch-major inside the loop
        attn_intermediates.append(attn_w)          # (B, Tq, Tk), head-averaged softmax

    # Final LayerNorm (self.normalize = True), row-tiled.
    xf = pallas_layer_norm(xb.reshape(bsz * t, e),
                           params["final_ln_g"], params["final_ln_b"])
    x_out = xf.reshape(bsz, t, e).transpose(1, 0, 2)

    # Convert intermediates back to the module's time-major layout once, after the loop.
    intermediates = [x] + [ib.transpose(1, 0, 2) for ib in intermediates_b]
    return x_out, intermediates, attn_intermediates


# ----------------------------------------------------------------------------
# Deterministic parameter initialization
# ----------------------------------------------------------------------------

def _xavier(key, shape):
    limit = math.sqrt(6.0 / (shape[0] + shape[1]))
    return jax.random.uniform(key, shape, jnp.float32, -limit, limit)


def init_encoder_layer(key, e, num_heads, self_attention):
    ks = jax.random.split(key, 6)
    hd = e // num_heads
    scale = hd ** -0.5
    # Weight matrices are stored bf16 (MXU-native on v6e/v7x, half the VMEM/HBM traffic);
    # biases / LN params stay f32 (added to f32 accumulators).
    wq = (_xavier(ks[0], (e, e)) * scale).astype(jnp.bfloat16)   # fold 1/sqrt(head_dim)
    wk = _xavier(ks[1], (e, e)).astype(jnp.bfloat16)
    wv = _xavier(ks[2], (e, e)).astype(jnp.bfloat16)
    p = dict(
        wo=_xavier(ks[3], (e, e)).astype(jnp.bfloat16),
        bo=jnp.zeros((1, e), jnp.float32),
        ln0_g=jnp.ones((1, e), jnp.float32), ln0_b=jnp.zeros((1, e), jnp.float32),
        fc1_w=_xavier(ks[4], (e, 4 * e)).astype(jnp.bfloat16),
        fc1_b=jnp.zeros((1, 4 * e), jnp.float32),
        fc2_w=_xavier(ks[5], (4 * e, e)).astype(jnp.bfloat16),
        fc2_b=jnp.zeros((1, e), jnp.float32),
        ln1_g=jnp.ones((1, e), jnp.float32), ln1_b=jnp.zeros((1, e), jnp.float32),
    )
    if self_attention:   # Q from the (tiled) query rows, fused KV from the full slab
        p["wq"] = wq
        p["bq"] = jnp.zeros((1, e), jnp.float32)
        p["wkv"] = jnp.concatenate([wk, wv], axis=1)             # (E, 2E) bf16
        p["bkv"] = jnp.zeros((1, 2 * e), jnp.float32)
    else:                # cross-attention: q/k/v come from different tensors
        p["w_in"] = jnp.stack([wq, wk, wv])                      # (3, E, E) bf16
        p["b_in"] = jnp.zeros((3, 1, e), jnp.float32)
    return p


def init_transformer_decoder(key, e, num_heads, layers):
    ks = jax.random.split(key, 2 * layers)
    return dict(
        self=[init_encoder_layer(ks[2 * i], e, num_heads, True) for i in range(layers)],
        cross=[init_encoder_layer(ks[2 * i + 1], e, num_heads, False) for i in range(layers)],
        final_ln_g=jnp.ones((e,), jnp.float32),
        final_ln_b=jnp.zeros((e,), jnp.float32),
    )


# ----------------------------------------------------------------------------
# Demo
# ----------------------------------------------------------------------------

if __name__ == "__main__":
    embed_dim = 32
    num_heads = 4
    n_layers = 2
    batch = 2
    seq_q = 8      # target (query) sequence length
    seq_kv = 6     # cross-attention key/value sequence length

    root = jax.random.PRNGKey(0)
    k_par, k_x, k_xk, k_xv = jax.random.split(root, 4)

    params = init_transformer_decoder(k_par, embed_dim, num_heads, n_layers)

    x_in = jax.random.normal(k_x, (seq_q, batch, embed_dim), jnp.float32)
    x_in_k = jax.random.normal(k_xk, (seq_kv, batch, embed_dim), jnp.float32)
    x_in_v = jax.random.normal(k_xv, (seq_kv, batch, embed_dim), jnp.float32)

    out, intermediates, attn_ws = transformer_decoder_forward(
        params, x_in, x_in_k, x_in_v, key_padding_mask=None,
        num_heads=num_heads, layers=n_layers)
    jax.block_until_ready((out, intermediates, attn_ws))

    assert out.shape == (seq_q, batch, embed_dim)
    assert len(intermediates) == n_layers + 1
    assert all(t.shape == (seq_q, batch, embed_dim) for t in intermediates)
    assert len(attn_ws) == n_layers
    assert all(w.shape == (batch, seq_q, seq_kv) for w in attn_ws)
    assert bool(jnp.all(jnp.isfinite(out)))
    # cross-attn head-averaged softmax uses an exact reciprocal -> rows sum to ~1 tightly
    assert bool(jnp.all(jnp.abs(jnp.sum(attn_ws[0], axis=-1) - 1.0) < 1e-3))

    print("KERNEL_OK")
</pallas_src>

<mosaic_0001>
module attributes {stable_mosaic.version = 11 : i64} {
  func.func @self_attn_layer_kernel(%arg0: i32, %arg1: i32, %arg2: memref<1x8x32xf32, #tpu.memory_space<vmem>>, %arg3: memref<1x8x32xf32, #tpu.memory_space<vmem>>, %arg4: memref<1x1x8xf32, #tpu.memory_space<vmem>>, %arg5: memref<32x32xbf16, #tpu.memory_space<vmem>>, %arg6: memref<1x32xf32, #tpu.memory_space<vmem>>, %arg7: memref<32x64xbf16, #tpu.memory_space<vmem>>, %arg8: memref<1x64xf32, #tpu.memory_space<vmem>>, %arg9: memref<32x32xbf16, #tpu.memory_space<vmem>>, %arg10: memref<1x32xf32, #tpu.memory_space<vmem>>, %arg11: memref<1x32xf32, #tpu.memory_space<vmem>>, %arg12: memref<1x32xf32, #tpu.memory_space<vmem>>, %arg13: memref<32x128xbf16, #tpu.memory_space<vmem>>, %arg14: memref<1x128xf32, #tpu.memory_space<vmem>>, %arg15: memref<128x32xbf16, #tpu.memory_space<vmem>>, %arg16: memref<1x32xf32, #tpu.memory_space<vmem>>, %arg17: memref<1x32xf32, #tpu.memory_space<vmem>>, %arg18: memref<1x32xf32, #tpu.memory_space<vmem>>, %arg19: memref<1x8x32xf32, #tpu.memory_space<vmem>>, %arg20: memref<8x32xf32, #tpu.memory_space<vmem>>) attributes {dimension_semantics = [#tpu.dimension_semantics<parallel>, #tpu.dimension_semantics<parallel>], iteration_bounds = array<i64: 2, 1>, scalar_prefetch = 0 : i64, scratch_operands = 1 : i64, tpu.core_type = #tpu.core_type<tc>, window_params = [{transform_indices = @transform_0, window_bounds = array<i64: 1, 8, 32>}, {transform_indices = @transform_1, window_bounds = array<i64: 1, 8, 32>}, {transform_indices = @transform_2, window_bounds = array<i64: 1, 1, 8>}, {pipeline_mode = #tpu.pipeline_mode<synchronous>, transform_indices = @transform_3, window_bounds = array<i64: 32, 32>}, {pipeline_mode = #tpu.pipeline_mode<synchronous>, transform_indices = @transform_4, window_bounds = array<i64: 1, 32>}, {pipeline_mode = #tpu.pipeline_mode<synchronous>, transform_indices = @transform_5, window_bounds = array<i64: 32, 64>}, {pipeline_mode = #tpu.pipeline_mode<synchronous>, transform_indices = @transform_6, window_bounds = array<i64: 1, 64>}, {pipeline_mode = #tpu.pipeline_mode<synchronous>, transform_indices = @transform_7, window_bounds = array<i64: 32, 32>}, {pipeline_mode = #tpu.pipeline_mode<synchronous>, transform_indices = @transform_8, window_bounds = array<i64: 1, 32>}, {pipeline_mode = #tpu.pipeline_mode<synchronous>, transform_indices = @transform_9, window_bounds = array<i64: 1, 32>}, {pipeline_mode = #tpu.pipeline_mode<synchronous>, transform_indices = @transform_10, window_bounds = array<i64: 1, 32>}, {pipeline_mode = #tpu.pipeline_mode<synchronous>, transform_indices = @transform_11, window_bounds = array<i64: 32, 128>}, {pipeline_mode = #tpu.pipeline_mode<synchronous>, transform_indices = @transform_12, window_bounds = array<i64: 1, 128>}, {pipeline_mode = #tpu.pipeline_mode<synchronous>, transform_indices = @transform_13, window_bounds = array<i64: 128, 32>}, {pipeline_mode = #tpu.pipeline_mode<synchronous>, transform_indices = @transform_14, window_bounds = array<i64: 1, 32>}, {pipeline_mode = #tpu.pipeline_mode<synchronous>, transform_indices = @transform_15, window_bounds = array<i64: 1, 32>}, {pipeline_mode = #tpu.pipeline_mode<synchronous>, transform_indices = @transform_16, window_bounds = array<i64: 1, 32>}, {transform_indices = @transform_17, window_bounds = array<i64: 1, 8, 32>}]} {
    %c0 = arith.constant 0 : index
    %c0_0 = arith.constant 0 : index
    %c0_1 = arith.constant 0 : index
    %0 = vector.load %arg2[%c0, %c0_0, %c0_1] : memref<1x8x32xf32, #tpu.memory_space<vmem>>, vector<1x8x32xf32>
    %1 = vector.shape_cast %0 : vector<1x8x32xf32> to vector<8x32xf32>
    %2 = arith.truncf %1 : vector<8x32xf32> to vector<8x32xbf16>
    %c0_2 = arith.constant 0 : index
    %c0_3 = arith.constant 0 : index
    %3 = vector.load %arg5[%c0_2, %c0_3] : memref<32x32xbf16, #tpu.memory_space<vmem>>, vector<32x32xbf16>
    %cst = arith.constant dense<0.000000e+00> : vector<8x32xf32>
    %4 = tpu.matmul %2, %3, %cst {dimension_numbers = #tpu.dot_dimension_numbers<[1], [0], [0], [1], [0, 0, 1, 1], [], []>} : vector<8x32xbf16>, vector<32x32xbf16>, vector<8x32xf32> -> vector<8x32xf32>
    %c0_4 = arith.constant 0 : index
    %c0_5 = arith.constant 0 : index
    %5 = vector.load %arg6[%c0_4, %c0_5] : memref<1x32xf32, #tpu.memory_space<vmem>>, vector<1x32xf32>
    %6 = vector.broadcast %5 : vector<1x32xf32> to vector<8x32xf32>
    %7 = arith.addf %4, %6 : vector<8x32xf32>
    %c0_6 = arith.constant 0 : index
    %c0_7 = arith.constant 0 : index
    %c0_8 = arith.constant 0 : index
    %8 = vector.load %arg3[%c0_6, %c0_7, %c0_8] : memref<1x8x32xf32, #tpu.memory_space<vmem>>, vector<1x8x32xf32>
    %9 = vector.shape_cast %8 : vector<1x8x32xf32> to vector<8x32xf32>
    %10 = arith.truncf %9 : vector<8x32xf32> to vector<8x32xbf16>
    %c0_9 = arith.constant 0 : index
    %c0_10 = arith.constant 0 : index
    %11 = vector.load %arg7[%c0_9, %c0_10] : memref<32x64xbf16, #tpu.memory_space<vmem>>, vector<32x64xbf16>
    %cst_11 = arith.constant dense<0.000000e+00> : vector<8x64xf32>
    %12 = tpu.matmul %10, %11, %cst_11 {dimension_numbers = #tpu.dot_dimension_numbers<[1], [0], [0], [1], [0, 0, 1, 1], [], []>} : vector<8x32xbf16>, vector<32x64xbf16>, vector<8x64xf32> -> vector<8x64xf32>
    %c0_12 = arith.constant 0 : index
    %c0_13 = arith.constant 0 : index
    %13 = vector.load %arg8[%c0_12, %c0_13] : memref<1x64xf32, #tpu.memory_space<vmem>>, vector<1x64xf32>
    %14 = vector.broadcast %13 : vector<1x64xf32> to vector<8x64xf32>
    %15 = arith.addf %12, %14 : vector<8x64xf32>
    %16 = vector.extract_strided_slice %15 {offsets = [0, 0], sizes = [8, 32], strides = [1, 1]} : vector<8x64xf32> to vector<8x32xf32>
    %17 = vector.extract_strided_slice %15 {offsets = [0, 32], sizes = [8, 32], strides = [1, 1]} : vector<8x64xf32> to vector<8x32xf32>
    %c0_14 = arith.constant 0 : index
    %c0_15 = arith.constant 0 : index
    %c0_16 = arith.constant 0 : index
    %18 = vector.load %arg4[%c0_14, %c0_15, %c0_16] : memref<1x1x8xf32, #tpu.memory_space<vmem>>, vector<1x1x8xf32>
    %19 = vector.shape_cast %18 : vector<1x1x8xf32> to vector<1x8xf32>
    %20 = vector.shape_cast %19 : vector<1x8xf32> to vector<1x8xf32>
    %21 = vector.broadcast %20 : vector<1x8xf32> to vector<8x8xf32>
    %22 = arith.truncf %7 : vector<8x32xf32> to vector<8x32xbf16>
    %23 = arith.truncf %16 : vector<8x32xf32> to vector<8x32xbf16>
    %24 = arith.truncf %17 : vector<8x32xf32> to vector<8x32xbf16>
    %25 = vector.extract_strided_slice %22 {offsets = [0, 0], sizes = [8, 8], strides = [1, 1]} : vector<8x32xbf16> to vector<8x8xbf16>
    %26 = vector.extract_strided_slice %23 {offsets = [0, 0], sizes = [8, 8], strides = [1, 1]} : vector<8x32xbf16> to vector<8x8xbf16>
    %cst_17 = arith.constant dense<0.000000e+00> : vector<8x8xf32>
    %27 = tpu.matmul %25, %26, %cst_17 {dimension_numbers = #tpu.dot_dimension_numbers<[1], [1], [0], [0], [0, 0, 1, 0], [], []>} : vector<8x8xbf16>, vector<8x8xbf16>, vector<8x8xf32> -> vector<8x8xf32>
    %28 = arith.addf %27, %21 : vector<8x8xf32>
    %cst_18 = arith.constant dense<0xFF800000> : vector<8xf32>
    %29 = vector.multi_reduction <maximumf>, %28, %cst_18 [1] : vector<8x8xf32> to vector<8xf32>
    %30 = vector.shape_cast %29 : vector<8xf32> to vector<8x1xf32>
    %31 = vector.broadcast %30 : vector<8x1xf32> to vector<8x8xf32>
    %32 = arith.subf %28, %31 : vector<8x8xf32>
    %33 = math.exp %32 : vector<8x8xf32>
    %cst_19 = arith.constant dense<0.000000e+00> : vector<8xf32>
    %34 = vector.multi_reduction <add>, %33, %cst_19 [1] : vector<8x8xf32> to vector<8xf32>
    %35 = vector.shape_cast %34 : vector<8xf32> to vector<8x1xf32>
    %36 = tpu.reciprocal %35 {approx = true} : vector<8x1xf32> -> vector<8x1xf32>
    %37 = vector.broadcast %36 : vector<8x1xf32> to vector<8x8xf32>
    %38 = arith.mulf %33, %37 : vector<8x8xf32>
    %39 = arith.truncf %38 : vector<8x8xf32> to vector<8x8xbf16>
    %40 = vector.extract_strided_slice %24 {offsets = [0, 0], sizes = [8, 8], strides = [1, 1]} : vector<8x32xbf16> to vector<8x8xbf16>
    %cst_20 = arith.constant dense<0.000000e+00> : vector<8x8xf32>
    %41 = tpu.matmul %39, %40, %cst_20 {dimension_numbers = #tpu.dot_dimension_numbers<[1], [0], [0], [1], [0, 0, 1, 1], [], []>} : vector<8x8xbf16>, vector<8x8xbf16>, vector<8x8xf32> -> vector<8x8xf32>
    %c0_21 = arith.constant 0 : index
    %c0_22 = arith.constant 0 : index
    %42 = vector.load %arg20[%c0_21, %c0_22] : memref<8x32xf32, #tpu.memory_space<vmem>>, vector<8x8xf32>
    tpu.vector_store %arg20[%c0_21, %c0_22], %41 {strides = array<i32>} : memref<8x32xf32, #tpu.memory_space<vmem>>, vector<8x8xf32>,
    %43 = vector.extract_strided_slice %22 {offsets = [0, 8], sizes = [8, 8], strides = [1, 1]} : vector<8x32xbf16> to vector<8x8xbf16>
    %44 = vector.extract_strided_slice %23 {offsets = [0, 8], sizes = [8, 8], strides = [1, 1]} : vector<8x32xbf16> to vector<8x8xbf16>
    %cst_23 = arith.constant dense<0.000000e+00> : vector<8x8xf32>
    %45 = tpu.matmul %43, %44, %cst_23 {dimension_numbers = #tpu.dot_dimension_numbers<[1], [1], [0], [0], [0, 0, 1, 0], [], []>} : vector<8x8xbf16>, vector<8x8xbf16>, vector<8x8xf32> -> vector<8x8xf32>
    %46 = arith.addf %45, %21 : vector<8x8xf32>
    %cst_24 = arith.constant dense<0xFF800000> : vector<8xf32>
    %47 = vector.multi_reduction <maximumf>, %46, %cst_24 [1] : vector<8x8xf32> to vector<8xf32>
    %48 = vector.shape_cast %47 : vector<8xf32> to vector<8x1xf32>
    %49 = vector.broadcast %48 : vector<8x1xf32> to vector<8x8xf32>
    %50 = arith.subf %46, %49 : vector<8x8xf32>
    %51 = math.exp %50 : vector<8x8xf32>
    %cst_25 = arith.constant dense<0.000000e+00> : vector<8xf32>
    %52 = vector.multi_reduction <add>, %51, %cst_25 [1] : vector<8x8xf32> to vector<8xf32>
    %53 = vector.shape_cast %52 : vector<8xf32> to vector<8x1xf32>
    %54 = tpu.reciprocal %53 {approx = true} : vector<8x1xf32> -> vector<8x1xf32>
    %55 = vector.broadcast %54 : vector<8x1xf32> to vector<8x8xf32>
    %56 = arith.mulf %51, %55 : vector<8x8xf32>
    %57 = arith.truncf %56 : vector<8x8xf32> to vector<8x8xbf16>
    %58 = vector.extract_strided_slice %24 {offsets = [0, 8], sizes = [8, 8], strides = [1, 1]} : vector<8x32xbf16> to vector<8x8xbf16>
    %cst_26 = arith.constant dense<0.000000e+00> : vector<8x8xf32>
    %59 = tpu.matmul %57, %58, %cst_26 {dimension_numbers = #tpu.dot_dimension_numbers<[1], [0], [0], [1], [0, 0, 1, 1], [], []>} : vector<8x8xbf16>, vector<8x8xbf16>, vector<8x8xf32> -> vector<8x8xf32>
    %c0_27 = arith.constant 0 : index
    %c8 = arith.constant 8 : index
    %60 = vector.load %arg20[%c0_27, %c8] : memref<8x32xf32, #tpu.memory_space<vmem>>, vector<8x8xf32>
    tpu.vector_store %arg20[%c0_27, %c8], %59 {strides = array<i32>} : memref<8x32xf32, #tpu.memory_space<vmem>>, vector<8x8xf32>,
    %61 = vector.extract_strided_slice %22 {offsets = [0, 16], sizes = [8, 8], strides = [1, 1]} : vector<8x32xbf16> to vector<8x8xbf16>
    %62 = vector.extract_strided_slice %23 {offsets = [0, 16], sizes = [8, 8], strides = [1, 1]} : vector<8x32xbf16> to vector<8x8xbf16>
    %cst_28 = arith.constant dense<0.000000e+00> : vector<8x8xf32>
    %63 = tpu.matmul %61, %62, %cst_28 {dimension_numbers = #tpu.dot_dimension_numbers<[1], [1], [0], [0], [0, 0, 1, 0], [], []>} : vector<8x8xbf16>, vector<8x8xbf16>, vector<8x8xf32> -> vector<8x8xf32>
    %64 = arith.addf %63, %21 : vector<8x8xf32>
    %cst_29 = arith.constant dense<0xFF800000> : vector<8xf32>
    %65 = vector.multi_reduction <maximumf>, %64, %cst_29 [1] : vector<8x8xf32> to vector<8xf32>
    %66 = vector.shape_cast %65 : vector<8xf32> to vector<8x1xf32>
    %67 = vector.broadcast %66 : vector<8x1xf32> to vector<8x8xf32>
    %68 = arith.subf %64, %67 : vector<8x8xf32>
    %69 = math.exp %68 : vector<8x8xf32>
    %cst_30 = arith.constant dense<0.000000e+00> : vector<8xf32>
    %70 = vector.multi_reduction <add>, %69, %cst_30 [1] : vector<8x8xf32> to vector<8xf32>
    %71 = vector.shape_cast %70 : vector<8xf32> to vector<8x1xf32>
    %72 = tpu.reciprocal %71 {approx = true} : vector<8x1xf32> -> vector<8x1xf32>
    %73 = vector.broadcast %72 : vector<8x1xf32> to vector<8x8xf32>
    %74 = arith.mulf %69, %73 : vector<8x8xf32>
    %75 = arith.truncf %74 : vector<8x8xf32> to vector<8x8xbf16>
    %76 = vector.extract_strided_slice %24 {offsets = [0, 16], sizes = [8, 8], strides = [1, 1]} : vector<8x32xbf16> to vector<8x8xbf16>
    %cst_31 = arith.constant dense<0.000000e+00> : vector<8x8xf32>
    %77 = tpu.matmul %75, %76, %cst_31 {dimension_numbers = #tpu.dot_dimension_numbers<[1], [0], [0], [1], [0, 0, 1, 1], [], []>} : vector<8x8xbf16>, vector<8x8xbf16>, vector<8x8xf32> -> vector<8x8xf32>
    %c0_32 = arith.constant 0 : index
    %c16 = arith.constant 16 : index
    %78 = vector.load %arg20[%c0_32, %c16] : memref<8x32xf32, #tpu.memory_space<vmem>>, vector<8x8xf32>
    tpu.vector_store %arg20[%c0_32, %c16], %77 {strides = array<i32>} : memref<8x32xf32, #tpu.memory_space<vmem>>, vector<8x8xf32>,
    %79 = vector.extract_strided_slice %22 {offsets = [0, 24], sizes = [8, 8], strides = [1, 1]} : vector<8x32xbf16> to vector<8x8xbf16>
    %80 = vector.extract_strided_slice %23 {offsets = [0, 24], sizes = [8, 8], strides = [1, 1]} : vector<8x32xbf16> to vector<8x8xbf16>
    %cst_33 = arith.constant dense<0.000000e+00> : vector<8x8xf32>
    %81 = tpu.matmul %79, %80, %cst_33 {dimension_numbers = #tpu.dot_dimension_numbers<[1], [1], [0], [0], [0, 0, 1, 0], [], []>} : vector<8x8xbf16>, vector<8x8xbf16>, vector<8x8xf32> -> vector<8x8xf32>
    %82 = arith.addf %81, %21 : vector<8x8xf32>
    %cst_34 = arith.constant dense<0xFF800000> : vector<8xf32>
    %83 = vector.multi_reduction <maximumf>, %82, %cst_34 [1] : vector<8x8xf32> to vector<8xf32>
    %84 = vector.shape_cast %83 : vector<8xf32> to vector<8x1xf32>
    %85 = vector.broadcast %84 : vector<8x1xf32> to vector<8x8xf32>
    %86 = arith.subf %82, %85 : vector<8x8xf32>
    %87 = math.exp %86 : vector<8x8xf32>
    %cst_35 = arith.constant dense<0.000000e+00> : vector<8xf32>
    %88 = vector.multi_reduction <add>, %87, %cst_35 [1] : vector<8x8xf32> to vector<8xf32>
    %89 = vector.shape_cast %88 : vector<8xf32> to vector<8x1xf32>
    %90 = tpu.reciprocal %89 {approx = true} : vector<8x1xf32> -> vector<8x1xf32>
    %91 = vector.broadcast %90 : vector<8x1xf32> to vector<8x8xf32>
    %92 = arith.mulf %87, %91 : vector<8x8xf32>
    %93 = arith.truncf %92 : vector<8x8xf32> to vector<8x8xbf16>
    %94 = vector.extract_strided_slice %24 {offsets = [0, 24], sizes = [8, 8], strides = [1, 1]} : vector<8x32xbf16> to vector<8x8xbf16>
    %cst_36 = arith.constant dense<0.000000e+00> : vector<8x8xf32>
    %95 = tpu.matmul %93, %94, %cst_36 {dimension_numbers = #tpu.dot_dimension_numbers<[1], [0], [0], [1], [0, 0, 1, 1], [], []>} : vector<8x8xbf16>, vector<8x8xbf16>, vector<8x8xf32> -> vector<8x8xf32>
    %c0_37 = arith.constant 0 : index
    %c24 = arith.constant 24 : index
    %96 = vector.load %arg20[%c0_37, %c24] : memref<8x32xf32, #tpu.memory_space<vmem>>, vector<8x8xf32>
    tpu.vector_store %arg20[%c0_37, %c24], %95 {strides = array<i32>} : memref<8x32xf32, #tpu.memory_space<vmem>>, vector<8x8xf32>,
    %c0_38 = arith.constant 0 : index
    %c0_39 = arith.constant 0 : index
    %97 = vector.load %arg20[%c0_38, %c0_39] : memref<8x32xf32, #tpu.memory_space<vmem>>, vector<8x32xf32>
    %98 = arith.truncf %97 : vector<8x32xf32> to vector<8x32xbf16>
    %c0_40 = arith.constant 0 : index
    %c0_41 = arith.constant 0 : index
    %99 = vector.load %arg9[%c0_40, %c0_41] : memref<32x32xbf16, #tpu.memory_space<vmem>>, vector<32x32xbf16>
    %cst_42 = arith.constant dense<0.000000e+00> : vector<8x32xf32>
    %100 = tpu.matmul %98, %99, %cst_42 {dimension_numbers = #tpu.dot_dimension_numbers<[1], [0], [0], [1], [0, 0, 1, 1], [], []>} : vector<8x32xbf16>, vector<32x32xbf16>, vector<8x32xf32> -> vector<8x32xf32>
    %c0_43 = arith.constant 0 : index
    %c0_44 = arith.constant 0 : index
    %101 = vector.load %arg10[%c0_43, %c0_44] : memref<1x32xf32, #tpu.memory_space<vmem>>, vector<1x32xf32>
    %c0_45 = arith.constant 0 : index
    %c0_46 = arith.constant 0 : index
    %102 = vector.load %arg11[%c0_45, %c0_46] : memref<1x32xf32, #tpu.memory_space<vmem>>, vector<1x32xf32>
    %c0_47 = arith.constant 0 : index
    %c0_48 = arith.constant 0 : index
    %103 = vector.load %arg12[%c0_47, %c0_48] : memref<1x32xf32, #tpu.memory_space<vmem>>, vector<1x32xf32>
    %c0_49 = arith.constant 0 : index
    %c0_50 = arith.constant 0 : index
    %104 = vector.load %arg13[%c0_49, %c0_50] : memref<32x128xbf16, #tpu.memory_space<vmem>>, vector<32x128xbf16>
    %c0_51 = arith.constant 0 : index
    %c0_52 = arith.constant 0 : index
    %105 = vector.load %arg14[%c0_51, %c0_52] : memref<1x128xf32, #tpu.memory_space<vmem>>, vector<1x128xf32>
    %c0_53 = arith.constant 0 : index
    %c0_54 = arith.constant 0 : index
    %106 = vector.load %arg15[%c0_53, %c0_54] : memref<128x32xbf16, #tpu.memory_space<vmem>>, vector<128x32xbf16>
    %c0_55 = arith.constant 0 : index
    %c0_56 = arith.constant 0 : index
    %107 = vector.load %arg16[%c0_55, %c0_56] : memref<1x32xf32, #tpu.memory_space<vmem>>, vector<1x32xf32>
    %c0_57 = arith.constant 0 : index
    %c0_58 = arith.constant 0 : index
    %108 = vector.load %arg17[%c0_57, %c0_58] : memref<1x32xf32, #tpu.memory_space<vmem>>, vector<1x32xf32>
    %c0_59 = arith.constant 0 : index
    %c0_60 = arith.constant 0 : index
    %109 = vector.load %arg18[%c0_59, %c0_60] : memref<1x32xf32, #tpu.memory_space<vmem>>, vector<1x32xf32>
    %110 = arith.addf %1, %100 : vector<8x32xf32>
    %111 = vector.broadcast %101 : vector<1x32xf32> to vector<8x32xf32>
    %112 = arith.addf %110, %111 : vector<8x32xf32>
    %cst_61 = arith.constant dense<0.000000e+00> : vector<8xf32>
    %113 = vector.multi_reduction <add>, %112, %cst_61 [1] : vector<8x32xf32> to vector<8xf32>
    %114 = vector.shape_cast %113 : vector<8xf32> to vector<8x1xf32>
    %cst_62 = arith.constant 3.200000e+01 : f32
    %115 = vector.broadcast %cst_62 : f32 to vector<8x1xf32>
    %116 = arith.divf %114, %115 : vector<8x1xf32>
    %117 = vector.broadcast %116 : vector<8x1xf32> to vector<8x32xf32>
    %118 = arith.subf %112, %117 : vector<8x32xf32>
    %119 = arith.mulf %118, %118 : vector<8x32xf32>
    %cst_63 = arith.constant dense<0.000000e+00> : vector<8xf32>
    %120 = vector.multi_reduction <add>, %119, %cst_63 [1] : vector<8x32xf32> to vector<8xf32>
    %121 = vector.shape_cast %120 : vector<8xf32> to vector<8x1xf32>
    %cst_64 = arith.constant 3.200000e+01 : f32
    %122 = vector.broadcast %cst_64 : f32 to vector<8x1xf32>
    %123 = arith.divf %121, %122 : vector<8x1xf32>
    %124 = vector.broadcast %116 : vector<8x1xf32> to vector<8x32xf32>
    %125 = arith.subf %112, %124 : vector<8x32xf32>
    %cst_65 = arith.constant 9.99999974E-6 : f32
    %126 = vector.broadcast %cst_65 : f32 to vector<8x1xf32>
    %127 = arith.addf %123, %126 : vector<8x1xf32>
    %128 = math.rsqrt %127 : vector<8x1xf32>
    %129 = vector.broadcast %128 : vector<8x1xf32> to vector<8x32xf32>
    %130 = arith.mulf %125, %129 : vector<8x32xf32>
    %131 = vector.broadcast %102 : vector<1x32xf32> to vector<8x32xf32>
    %132 = arith.mulf %130, %131 : vector<8x32xf32>
    %133 = vector.broadcast %103 : vector<1x32xf32> to vector<8x32xf32>
    %134 = arith.addf %132, %133 : vector<8x32xf32>
    %135 = arith.truncf %134 : vector<8x32xf32> to vector<8x32xbf16>
    %cst_66 = arith.constant dense<0.000000e+00> : vector<8x128xf32>
    %136 = tpu.matmul %135, %104, %cst_66 {dimension_numbers = #tpu.dot_dimension_numbers<[1], [0], [0], [1], [0, 0, 1, 1], [], []>} : vector<8x32xbf16>, vector<32x128xbf16>, vector<8x128xf32> -> vector<8x128xf32>
    %137 = vector.broadcast %105 : vector<1x128xf32> to vector<8x128xf32>
    %138 = arith.addf %136, %137 : vector<8x128xf32>
    %cst_67 = arith.constant 0.000000e+00 : f32
    %139 = vector.broadcast %cst_67 : f32 to vector<8x128xf32>
    %140 = arith.maximumf %138, %139 : vector<8x128xf32>
    %141 = arith.truncf %140 : vector<8x128xf32> to vector<8x128xbf16>
    %cst_68 = arith.constant dense<0.000000e+00> : vector<8x32xf32>
    %142 = tpu.matmul %141, %106, %cst_68 {dimension_numbers = #tpu.dot_dimension_numbers<[1], [0], [0], [1], [0, 0, 1, 1], [], []>} : vector<8x128xbf16>, vector<128x32xbf16>, vector<8x32xf32> -> vector<8x32xf32>
    %143 = vector.broadcast %107 : vector<1x32xf32> to vector<8x32xf32>
    %144 = arith.addf %142, %143 : vector<8x32xf32>
    %145 = arith.addf %134, %144 : vector<8x32xf32>
    %cst_69 = arith.constant dense<0.000000e+00> : vector<8xf32>
    %146 = vector.multi_reduction <add>, %145, %cst_69 [1] : vector<8x32xf32> to vector<8xf32>
    %147 = vector.shape_cast %146 : vector<8xf32> to vector<8x1xf32>
    %cst_70 = arith.constant 3.200000e+01 : f32
    %148 = vector.broadcast %cst_70 : f32 to vector<8x1xf32>
    %149 = arith.divf %147, %148 : vector<8x1xf32>
    %150 = vector.broadcast %149 : vector<8x1xf32> to vector<8x32xf32>
    %151 = arith.subf %145, %150 : vector<8x32xf32>
    %152 = arith.mulf %151, %151 : vector<8x32xf32>
    %cst_71 = arith.constant dense<0.000000e+00> : vector<8xf32>
    %153 = vector.multi_reduction <add>, %152, %cst_71 [1] : vector<8x32xf32> to vector<8xf32>
    %154 = vector.shape_cast %153 : vector<8xf32> to vector<8x1xf32>
    %cst_72 = arith.constant 3.200000e+01 : f32
    %155 = vector.broadcast %cst_72 : f32 to vector<8x1xf32>
    %156 = arith.divf %154, %155 : vector<8x1xf32>
    %157 = vector.broadcast %149 : vector<8x1xf32> to vector<8x32xf32>
    %158 = arith.subf %145, %157 : vector<8x32xf32>
    %cst_73 = arith.constant 9.99999974E-6 : f32
    %159 = vector.broadcast %cst_73 : f32 to vector<8x1xf32>
    %160 = arith.addf %156, %159 : vector<8x1xf32>
    %161 = math.rsqrt %160 : vector<8x1xf32>
    %162 = vector.broadcast %161 : vector<8x1xf32> to vector<8x32xf32>
    %163 = arith.mulf %158, %162 : vector<8x32xf32>
    %164 = vector.broadcast %108 : vector<1x32xf32> to vector<8x32xf32>
    %165 = arith.mulf %163, %164 : vector<8x32xf32>
    %166 = vector.broadcast %109 : vector<1x32xf32> to vector<8x32xf32>
    %167 = arith.addf %165, %166 : vector<8x32xf32>
    %c0_74 = arith.constant 0 : index
    %c0_75 = arith.constant 0 : index
    %c0_76 = arith.constant 0 : index
    %168 = vector.load %arg19[%c0_74, %c0_75, %c0_76] : memref<1x8x32xf32, #tpu.memory_space<vmem>>, vector<1x8x32xf32>
    %169 = vector.shape_cast %168 : vector<1x8x32xf32> to vector<8x32xf32>
    %170 = vector.shape_cast %167 : vector<8x32xf32> to vector<1x8x32xf32>
    tpu.vector_store %arg19[%c0_74, %c0_75, %c0_76], %170 {strides = array<i32>} : memref<1x8x32xf32, #tpu.memory_space<vmem>>, vector<1x8x32xf32>,
    return
  }
  func.func @transform_0(%arg0: i32, %arg1: i32) -> (i32, i32, i32) {
    %c0_i32 = arith.constant 0 : i32
    %c0_i32_0 = arith.constant 0 : i32
    return %arg0, %arg1, %c0_i32 : i32, i32, i32
  }
  func.func @transform_1(%arg0: i32, %arg1: i32) -> (i32, i32, i32) {
    %c0_i32 = arith.constant 0 : i32
    %c0_i32_0 = arith.constant 0 : i32
    %c0_i32_1 = arith.constant 0 : i32
    return %arg0, %c0_i32, %c0_i32_0 : i32, i32, i32
  }
  func.func @transform_2(%arg0: i32, %arg1: i32) -> (i32, i32, i32) {
    %c0_i32 = arith.constant 0 : i32
    %c0_i32_0 = arith.constant 0 : i32
    %c0_i32_1 = arith.constant 0 : i32
    return %arg0, %c0_i32, %c0_i32_0 : i32, i32, i32
  }
  func.func @transform_3(%arg0: i32, %arg1: i32) -> (i32, i32) {
    %c0_i32 = arith.constant 0 : i32
    %c0_i32_0 = arith.constant 0 : i32
    %c0_i32_1 = arith.constant 0 : i32
    return %c0_i32, %c0_i32_0 : i32, i32
  }
  func.func @transform_4(%arg0: i32, %arg1: i32) -> (i32, i32) {
    %c0_i32 = arith.constant 0 : i32
    %c0_i32_0 = arith.constant 0 : i32
    %c0_i32_1 = arith.constant 0 : i32
    return %c0_i32, %c0_i32_0 : i32, i32
  }
  func.func @transform_5(%arg0: i32, %arg1: i32) -> (i32, i32) {
    %c0_i32 = arith.constant 0 : i32
    %c0_i32_0 = arith.constant 0 : i32
    %c0_i32_1 = arith.constant 0 : i32
    return %c0_i32, %c0_i32_0 : i32, i32
  }
  func.func @transform_6(%arg0: i32, %arg1: i32) -> (i32, i32) {
    %c0_i32 = arith.constant 0 : i32
    %c0_i32_0 = arith.constant 0 : i32
    %c0_i32_1 = arith.constant 0 : i32
    return %c0_i32, %c0_i32_0 : i32, i32
  }
  func.func @transform_7(%arg0: i32, %arg1: i32) -> (i32, i32) {
    %c0_i32 = arith.constant 0 : i32
    %c0_i32_0 = arith.constant 0 : i32
    %c0_i32_1 = arith.constant 0 : i32
    return %c0_i32, %c0_i32_0 : i32, i32
  }
  func.func @transform_8(%arg0: i32, %arg1: i32) -> (i32, i32) {
    %c0_i32 = arith.constant 0 : i32
    %c0_i32_0 = arith.constant 0 : i32
    %c0_i32_1 = arith.constant 0 : i32
    return %c0_i32, %c0_i32_0 : i32, i32
  }
  func.func @transform_9(%arg0: i32, %arg1: i32) -> (i32, i32) {
    %c0_i32 = arith.constant 0 : i32
    %c0_i32_0 = arith.constant 0 : i32
    %c0_i32_1 = arith.constant 0 : i32
    return %c0_i32, %c0_i32_0 : i32, i32
  }
  func.func @transform_10(%arg0: i32, %arg1: i32) -> (i32, i32) {
    %c0_i32 = arith.constant 0 : i32
    %c0_i32_0 = arith.constant 0 : i32
    %c0_i32_1 = arith.constant 0 : i32
    return %c0_i32, %c0_i32_0 : i32, i32
  }
  func.func @transform_11(%arg0: i32, %arg1: i32) -> (i32, i32) {
    %c0_i32 = arith.constant 0 : i32
    %c0_i32_0 = arith.constant 0 : i32
    %c0_i32_1 = arith.constant 0 : i32
    return %c0_i32, %c0_i32_0 : i32, i32
  }
  func.func @transform_12(%arg0: i32, %arg1: i32) -> (i32, i32) {
    %c0_i32 = arith.constant 0 : i32
    %c0_i32_0 = arith.constant 0 : i32
    %c0_i32_1 = arith.constant 0 : i32
    return %c0_i32, %c0_i32_0 : i32, i32
  }
  func.func @transform_13(%arg0: i32, %arg1: i32) -> (i32, i32) {
    %c0_i32 = arith.constant 0 : i32
    %c0_i32_0 = arith.constant 0 : i32
    %c0_i32_1 = arith.constant 0 : i32
    return %c0_i32, %c0_i32_0 : i32, i32
  }
  func.func @transform_14(%arg0: i32, %arg1: i32) -> (i32, i32) {
    %c0_i32 = arith.constant 0 : i32
    %c0_i32_0 = arith.constant 0 : i32
    %c0_i32_1 = arith.constant 0 : i32
    return %c0_i32, %c0_i32_0 : i32, i32
  }
  func.func @transform_15(%arg0: i32, %arg1: i32) -> (i32, i32) {
    %c0_i32 = arith.constant 0 : i32
    %c0_i32_0 = arith.constant 0 : i32
    %c0_i32_1 = arith.constant 0 : i32
    return %c0_i32, %c0_i32_0 : i32, i32
  }
  func.func @transform_16(%arg0: i32, %arg1: i32) -> (i32, i32) {
    %c0_i32 = arith.constant 0 : i32
    %c0_i32_0 = arith.constant 0 : i32
    %c0_i32_1 = arith.constant 0 : i32
    return %c0_i32, %c0_i32_0 : i32, i32
  }
  func.func @transform_17(%arg0: i32, %arg1: i32) -> (i32, i32, i32) {
    %c0_i32 = arith.constant 0 : i32
    %c0_i32_0 = arith.constant 0 : i32
    return %arg0, %arg1, %c0_i32 : i32, i32, i32
  }
}

</mosaic_0001>

<llo_original>
// kernel: tpu_custom_call.1
$region0: #{tpu_custom_call.1}
  #allocation0 [shape = 'u32[]', space=smem, size = 0x4, offset = 0x4, fixed_abs, tag = 'smem constant byte address 0x4 - core index']
  #allocation1 [shape = 'u32[144,128]{1,0:T(1,128)}', space=vmem, size = 0x12000, scoped, tag = 'internal scratch']
  #allocation2 [shape = 'f32[8,32]{1,0:T(8,128)}', space=vmem, size = 0x1000, scoped, tag = 'scratch operand']
  %s0 = inlined_call_operand.hbm [shape: f32[2,8,32], index: 0, kind: input, shape index: {}]
  %s1 = inlined_call_operand.hbm [shape: f32[2,8,32], index: 1, kind: input, shape index: {}]
  %s2 = inlined_call_operand.hbm [shape: f32[2,1,8], index: 2, kind: input, shape index: {}]
  %s3 = inlined_call_operand.hbm [shape: bf16[32,32], index: 3, kind: input, shape index: {}]
  %s4 = inlined_call_operand.hbm [shape: f32[1,32], index: 4, kind: input, shape index: {}]
  %s5 = inlined_call_operand.hbm [shape: bf16[32,64], index: 5, kind: input, shape index: {}]
  %s6 = inlined_call_operand.hbm [shape: f32[1,64], index: 6, kind: input, shape index: {}]
  %s7 = inlined_call_operand.hbm [shape: bf16[32,32], index: 7, kind: input, shape index: {}]
  %s8 = inlined_call_operand.hbm [shape: f32[1,32], index: 8, kind: input, shape index: {}]
  %s9 = inlined_call_operand.hbm [shape: f32[1,32], index: 9, kind: input, shape index: {}]
  %s10 = inlined_call_operand.hbm [shape: f32[1,32], index: 10, kind: input, shape index: {}]
  %s11 = inlined_call_operand.hbm [shape: bf16[32,128], index: 11, kind: input, shape index: {}]
  %s12 = inlined_call_operand.hbm [shape: f32[1,128], index: 12, kind: input, shape index: {}]
  %s13 = inlined_call_operand.hbm [shape: bf16[128,32], index: 13, kind: input, shape index: {}]
  %s14 = inlined_call_operand.hbm [shape: f32[1,32], index: 14, kind: input, shape index: {}]
  %s15 = inlined_call_operand.hbm [shape: f32[1,32], index: 15, kind: input, shape index: {}]
  %s16 = inlined_call_operand.hbm [shape: f32[1,32], index: 16, kind: input, shape index: {}]
  %s17 = inlined_call_operand.hbm [shape: f32[2,8,32], index: 17, kind: output, shape index: {}]
  %s18 = sld [smem:[#allocation0]]
  $region169: #{tpu_custom_call.1} parent=0
    _
  %s20 = ssub.s32 1, %s18
  %s21 = scalar_select 0, %s20, %s18
  $region1: #{tpu_custom_call.1} parent=0
    #allocation3 [shape = 'u8[8192]{0}', space=vmem, size = 0x2000, scoped, tag = 'input window, operand 0']
    #allocation4 [shape = 's32[2]{0}', space=sflag, size = 0x8, scoped, tag = 'scoped memory for tpu_custom_call.1']
    #allocation5 [shape = 's32[2]{0}', space=sflag, size = 0x8, scoped, tag = 'scoped memory for tpu_custom_call.1']
    #allocation6 [shape = 'u8[8192]{0}', space=vmem, size = 0x2000, scoped, tag = 'input window, operand 1']
    #allocation7 [shape = 's32[2]{0}', space=sflag, size = 0x8, scoped, tag = 'scoped memory for tpu_custom_call.1']
    #allocation8 [shape = 'u8[1024]{0}', space=vmem, size = 0x400, scoped, tag = 'input window, operand 2']
    #allocation9 [shape = 'u8[8192]{0}', space=vmem, size = 0x2000, scoped, tag = 'input window, operand 3, single buffered']
    #allocation10 [shape = 's32[1]{0}', space=sflag, size = 0x4, scoped, tag = 'scoped memory for tpu_custom_call.1']
    #allocation11 [shape = 'u8[512]{0}', space=vmem, size = 0x400, scoped, tag = 'input window, operand 4, single buffered']
    #allocation12 [shape = 'u8[8192]{0}', space=vmem, size = 0x2000, scoped, tag = 'input window, operand 5, single buffered']
    #allocation13 [shape = 's32[1]{0}', space=sflag, size = 0x4, scoped, tag = 'scoped memory for tpu_custom_call.1']
    #allocation14 [shape = 'u8[512]{0}', space=vmem, size = 0x400, scoped, tag = 'input window, operand 6, single buffered']
    #allocation15 [shape = 'u8[8192]{0}', space=vmem, size = 0x2000, scoped, tag = 'input window, operand 7, single buffered']
    #allocation16 [shape = 's32[1]{0}', space=sflag, size = 0x4, scoped, tag = 'scoped memory for tpu_custom_call.1']
    #allocation17 [shape = 'u8[512]{0}', space=vmem, size = 0x400, scoped, tag = 'input window, operand 8, single buffered']
    #allocation18 [shape = 'u8[512]{0}', space=vmem, size = 0x400, scoped, tag = 'input window, operand 9, single buffered']
    #allocation19 [shape = 's32[1]{0}', space=sflag, size = 0x4, scoped, tag = 'scoped memory for tpu_custom_call.1']
    #allocation20 [shape = 'u8[512]{0}', space=vmem, size = 0x400, scoped, tag = 'input window, operand 10, single buffered']
    #allocation21 [shape = 'u8[8192]{0}', space=vmem, size = 0x2000, scoped, tag = 'input window, operand 11, single buffered']
    #allocation22 [shape = 's32[1]{0}', space=sflag, size = 0x4, scoped, tag = 'scoped memory for tpu_custom_call.1']
    #allocation23 [shape = 'u8[512]{0}', space=vmem, size = 0x400, scoped, tag = 'input window, operand 12, single buffered']
    #allocation24 [shape = 'u8[32768]{0}', space=vmem, size = 0x8000, scoped, tag = 'input window, operand 13, single buffered']
    #allocation25 [shape = 's32[1]{0}', space=sflag, size = 0x4, scoped, tag = 'scoped memory for tpu_custom_call.1']
    #allocation26 [shape = 'u8[512]{0}', space=vmem, size = 0x400, scoped, tag = 'input window, operand 14, single buffered']
    #allocation27 [shape = 'u8[512]{0}', space=vmem, size = 0x400, scoped, tag = 'input window, operand 15, single buffered']
    #allocation28 [shape = 's32[1]{0}', space=sflag, size = 0x4, scoped, tag = 'scoped memory for tpu_custom_call.1']
    #allocation29 [shape = 'u8[512]{0}', space=vmem, size = 0x400, scoped, tag = 'input window, operand 16, single buffered']
    #allocation30 [shape = 'u8[8192]{0}', space=vmem, size = 0x2000, scoped, tag = 'output window, operand 0']
    %22 = vsyncpa [#allocation4], 0
    %s23 = scalar_lea.sflag [#allocation4], 1
    %24 = vsyncpa %s23, 0
    %25 = vsyncpa [#allocation7], 0
    %s26 = scalar_lea.sflag [#allocation7], 1
    %27 = vsyncpa %s26, 0
    %28 = vsyncpa [#allocation10], 0
    %29 = vsyncpa [#allocation13], 0
    %30 = vsyncpa [#allocation16], 0
    %31 = vsyncpa [#allocation19], 0
    %32 = vsyncpa [#allocation22], 0
    %33 = vsyncpa [#allocation25], 0
    %34 = vsyncpa [#allocation28], 0
    %35 = vsyncpa [#allocation5], 0
    %s36 = scalar_lea.sflag [#allocation5], 1
    %37 = vsyncpa %s36, 0
    loop: start=0, step=1, limit=4
    $region2: #{tpu_custom_call.1} parent=1 // loop_pre_header
      _
    $region3: #{tpu_custom_call.1} parent=1 // loop_header
      %s39 = sphi 0, %s43
      %p40 = scmp.ge.s32.totalorder %s39, 4
      %s46 = sphi 0, %s58
      %s47 = sphi 0, %s54
      %s48 = sphi 0, %s46
      %s49 = sphi 0, %s47
      %s50 = sphi 0, %s48
      %s51 = sphi 0, %s49
      %s63 = sphi 0, %s65
      %s66 = sphi 0, %s63
      %s67 = sphi 0, %s66
      %s83 = sphi 0, %s67
      %s89 = sphi 0, %s91
      %s92 = sphi 0, %s89
      %s93 = sphi 0, %s92
      %s109 = sphi 0, %s93
      %s115 = sphi 0, %s117
      %s118 = sphi 0, %s115
      %s119 = sphi 0, %s118
      %s135 = sphi 0, %s119
      %s139 = sphi 0, %s139
      %s141 = sphi 0, %s139
      %s142 = sphi 0, %s141
      %s156 = sphi 0, %s142
      %s160 = sphi 0, %s160
      %s162 = sphi 0, %s160
      %s163 = sphi 0, %s162
      %s177 = sphi 0, %s163
      %s181 = sphi 0, %s181
      %s183 = sphi 0, %s181
      %s184 = sphi 0, %s183
      %s198 = sphi 0, %s184
      %s202 = sphi 0, %s202
      %s204 = sphi 0, %s202
      %s205 = sphi 0, %s204
      %s219 = sphi 0, %s205
      %s223 = sphi 0, %s223
      %s225 = sphi 0, %s223
      %s226 = sphi 0, %s225
      %s240 = sphi 0, %s226
      %s244 = sphi 0, %s244
      %s246 = sphi 0, %s244
      %s247 = sphi 0, %s246
      %s261 = sphi 0, %s247
      %s265 = sphi 0, %s265
      %s267 = sphi 0, %s265
      %s268 = sphi 0, %s267
      %s282 = sphi 0, %s268
      %s286 = sphi 0, %s286
      %s288 = sphi 0, %s286
      %s289 = sphi 0, %s288
      %s303 = sphi 0, %s289
      %s307 = sphi 0, %s307
      %s309 = sphi 0, %s307
      %s310 = sphi 0, %s309
      %s324 = sphi 0, %s310
      %s328 = sphi 0, %s328
      %s330 = sphi 0, %s328
      %s331 = sphi 0, %s330
      %s345 = sphi 0, %s331
      %s349 = sphi 0, %s349
      %s351 = sphi 0, %s349
      %s352 = sphi 0, %s351
      %s366 = sphi 0, %s352
      %s370 = sphi 0, %s370
      %s372 = sphi 0, %s370
      %s373 = sphi 0, %s372
      %s387 = sphi 0, %s373
      %s391 = sphi 0, %s391
      %s393 = sphi 0, %s391
      %s394 = sphi 0, %s393
      %s408 = sphi 0, %s394
      %s412 = sphi 0, %s412
      %s414 = sphi 0, %s412
      %s415 = sphi 0, %s414
      %s429 = sphi 0, %s415
      %s437 = sphi 0, %s439
      %s440 = sphi 0, %s437
      %s441 = sphi 0, %s440
      %s457 = sphi 0, %s441
    $region4: #{tpu_custom_call.1} parent=1 // loop_header_branch
      %42 = sbr.rel (%p40) target = $region8
    $region5: #{tpu_custom_call.1} parent=1 // loop_body
      %s44 = ssub.s32 %s39, 1
      %s45 = ssub.s32 %s39, 2
      %s52 = sadd.s32 1, %s47
      %p53 = scmp.ge.s32.totalorder %s52, 1
      %s54 = scalar_select %p53, 0, %s52
      %s55 = sadd.s32 1, %s46
      %s56 = scalar_select %p53, %s55, %s46
      %p57 = scmp.ge.s32.totalorder %s56, 2
      %s58 = scalar_select %p57, 0, %s56
      %s59 = ssub.s32 %s46, %s58
      %s60 = ssub.s32 %s47, %s54
      %s61 = sor.u32 %s59, %s60
      %p62 = scmp.eq.s32.totalorder %s61, 0
      %s64 = sadd.s32 %s63, 1
      %s65 = scalar_select %p62, %s63, %s64
      %p68 = pneg %p62
      %p69 = scmp.eq.s32.totalorder %s39, 1
      %p70 = por %p68, %p69
      %p71 = scmp.ne.s32.totalorder %s63, %s66
      %p72 = scmp.eq.s32.totalorder %s39, 0
      %p73 = por %p71, %p72
      %p74 = scmp.ne.s32.totalorder %s63, %s66
      %p75 = scmp.eq.s32.totalorder %s44, 1
      %p76 = por %p74, %p75
      %p77 = scmp.ne.s32.totalorder %s66, %s67
      %p78 = scmp.eq.s32.totalorder %s44, 0
      %p79 = por %p77, %p78
      %p80 = scmp.ne.s32.totalorder %s66, %s67
      %p81 = scmp.eq.s32.totalorder %s45, 1
      %p82 = por %p80, %p81
      %p84 = scmp.ne.s32.totalorder %s67, %s83
      %p85 = scmp.eq.s32.totalorder %s45, 0
      %p86 = por %p84, %p85
      %s87 = ssub.s32 %s46, %s58
      %p88 = scmp.eq.s32.totalorder %s87, 0
      %s90 = sadd.s32 %s89, 1
      %s91 = scalar_select %p88, %s89, %s90
      %p94 = pneg %p88
      %p95 = scmp.eq.s32.totalorder %s39, 1
      %p96 = por %p94, %p95
      %p97 = scmp.ne.s32.totalorder %s89, %s92
      %p98 = scmp.eq.s32.totalorder %s39, 0
      %p99 = por %p97, %p98
      %p100 = scmp.ne.s32.totalorder %s89, %s92
      %p101 = scmp.eq.s32.totalorder %s44, 1
      %p102 = por %p100, %p101
      %p103 = scmp.ne.s32.totalorder %s92, %s93
      %p104 = scmp.eq.s32.totalorder %s44, 0
      %p105 = por %p103, %p104
      %p106 = scmp.ne.s32.totalorder %s92, %s93
      %p107 = scmp.eq.s32.totalorder %s45, 1
      %p108 = por %p106, %p107
      %p110 = scmp.ne.s32.totalorder %s93, %s109
      %p111 = scmp.eq.s32.totalorder %s45, 0
      %p112 = por %p110, %p111
      %s113 = ssub.s32 %s46, %s58
      %p114 = scmp.eq.s32.totalorder %s113, 0
      %s116 = sadd.s32 %s115, 1
      %s117 = scalar_select %p114, %s115, %s116
      %p120 = pneg %p114
      %p121 = scmp.eq.s32.totalorder %s39, 1
      %p122 = por %p120, %p121
      %p123 = scmp.ne.s32.totalorder %s115, %s118
      %p124 = scmp.eq.s32.totalorder %s39, 0
      %p125 = por %p123, %p124
      %p126 = scmp.ne.s32.totalorder %s115, %s118
      %p127 = scmp.eq.s32.totalorder %s44, 1
      %p128 = por %p126, %p127
      %p129 = scmp.ne.s32.totalorder %s118, %s119
      %p130 = scmp.eq.s32.totalorder %s44, 0
      %p131 = por %p129, %p130
      %p132 = scmp.ne.s32.totalorder %s118, %s119
      %p133 = scmp.eq.s32.totalorder %s45, 1
      %p134 = por %p132, %p133
      %p136 = scmp.ne.s32.totalorder %s119, %s135
      %p137 = scmp.eq.s32.totalorder %s45, 0
      %p138 = por %p136, %p137
      %s140 = sadd.s32 %s139, 1
      %p143 = scmp.eq.s32.totalorder %s39, 1
      %p144 = scmp.ne.s32.totalorder %s139, %s141
      %p145 = scmp.eq.s32.totalorder %s39, 0
      %p146 = por %p144, %p145
      %p147 = scmp.ne.s32.totalorder %s139, %s141
      %p148 = scmp.eq.s32.totalorder %s44, 1
      %p149 = por %p147, %p148
      %p150 = scmp.ne.s32.totalorder %s141, %s142
      %p151 = scmp.eq.s32.totalorder %s44, 0
      %p152 = por %p150, %p151
      %p153 = scmp.ne.s32.totalorder %s141, %s142
      %p154 = scmp.eq.s32.totalorder %s45, 1
      %p155 = por %p153, %p154
      %p157 = scmp.ne.s32.totalorder %s142, %s156
      %p158 = scmp.eq.s32.totalorder %s45, 0
      %p159 = por %p157, %p158
      %s161 = sadd.s32 %s160, 1
      %p164 = scmp.eq.s32.totalorder %s39, 1
      %p165 = scmp.ne.s32.totalorder %s160, %s162
      %p166 = scmp.eq.s32.totalorder %s39, 0
      %p167 = por %p165, %p166
      %p168 = scmp.ne.s32.totalorder %s160, %s162
      %p169 = scmp.eq.s32.totalorder %s44, 1
      %p170 = por %p168, %p169
      %p171 = scmp.ne.s32.totalorder %s162, %s163
      %p172 = scmp.eq.s32.totalorder %s44, 0
      %p173 = por %p171, %p172
      %p174 = scmp.ne.s32.totalorder %s162, %s163
      %p175 = scmp.eq.s32.totalorder %s45, 1
      %p176 = por %p174, %p175
      %p178 = scmp.ne.s32.totalorder %s163, %s177
      %p179 = scmp.eq.s32.totalorder %s45, 0
      %p180 = por %p178, %p179
      %s182 = sadd.s32 %s181, 1
      %p185 = scmp.eq.s32.totalorder %s39, 1
      %p186 = scmp.ne.s32.totalorder %s181, %s183
      %p187 = scmp.eq.s32.totalorder %s39, 0
      %p188 = por %p186, %p187
      %p189 = scmp.ne.s32.totalorder %s181, %s183
      %p190 = scmp.eq.s32.totalorder %s44, 1
      %p191 = por %p189, %p190
      %p192 = scmp.ne.s32.totalorder %s183, %s184
      %p193 = scmp.eq.s32.totalorder %s44, 0
      %p194 = por %p192, %p193
      %p195 = scmp.ne.s32.totalorder %s183, %s184
      %p196 = scmp.eq.s32.totalorder %s45, 1
      %p197 = por %p195, %p196
      %p199 = scmp.ne.s32.totalorder %s184, %s198
      %p200 = scmp.eq.s32.totalorder %s45, 0
      %p201 = por %p199, %p200
      %s203 = sadd.s32 %s202, 1
      %p206 = scmp.eq.s32.totalorder %s39, 1
      %p207 = scmp.ne.s32.totalorder %s202, %s204
      %p208 = scmp.eq.s32.totalorder %s39, 0
      %p209 = por %p207, %p208
      %p210 = scmp.ne.s32.totalorder %s202, %s204
      %p211 = scmp.eq.s32.totalorder %s44, 1
      %p212 = por %p210, %p211
      %p213 = scmp.ne.s32.totalorder %s204, %s205
      %p214 = scmp.eq.s32.totalorder %s44, 0
      %p215 = por %p213, %p214
      %p216 = scmp.ne.s32.totalorder %s204, %s205
      %p217 = scmp.eq.s32.totalorder %s45, 1
      %p218 = por %p216, %p217
      %p220 = scmp.ne.s32.totalorder %s205, %s219
      %p221 = scmp.eq.s32.totalorder %s45, 0
      %p222 = por %p220, %p221
      %s224 = sadd.s32 %s223, 1
      %p227 = scmp.eq.s32.totalorder %s39, 1
      %p228 = scmp.ne.s32.totalorder %s223, %s225
      %p229 = scmp.eq.s32.totalorder %s39, 0
      %p230 = por %p228, %p229
      %p231 = scmp.ne.s32.totalorder %s223, %s225
      %p232 = scmp.eq.s32.totalorder %s44, 1
      %p233 = por %p231, %p232
      %p234 = scmp.ne.s32.totalorder %s225, %s226
      %p235 = scmp.eq.s32.totalorder %s44, 0
      %p236 = por %p234, %p235
      %p237 = scmp.ne.s32.totalorder %s225, %s226
      %p238 = scmp.eq.s32.totalorder %s45, 1
      %p239 = por %p237, %p238
      %p241 = scmp.ne.s32.totalorder %s226, %s240
      %p242 = scmp.eq.s32.totalorder %s45, 0
      %p243 = por %p241, %p242
      %s245 = sadd.s32 %s244, 1
      %p248 = scmp.eq.s32.totalorder %s39, 1
      %p249 = scmp.ne.s32.totalorder %s244, %s246
      %p250 = scmp.eq.s32.totalorder %s39, 0
      %p251 = por %p249, %p250
      %p252 = scmp.ne.s32.totalorder %s244, %s246
      %p253 = scmp.eq.s32.totalorder %s44, 1
      %p254 = por %p252, %p253
      %p255 = scmp.ne.s32.totalorder %s246, %s247
      %p256 = scmp.eq.s32.totalorder %s44, 0
      %p257 = por %p255, %p256
      %p258 = scmp.ne.s32.totalorder %s246, %s247
      %p259 = scmp.eq.s32.totalorder %s45, 1
      %p260 = por %p258, %p259
      %p262 = scmp.ne.s32.totalorder %s247, %s261
      %p263 = scmp.eq.s32.totalorder %s45, 0
      %p264 = por %p262, %p263
      %s266 = sadd.s32 %s265, 1
      %p269 = scmp.eq.s32.totalorder %s39, 1
      %p270 = scmp.ne.s32.totalorder %s265, %s267
      %p271 = scmp.eq.s32.totalorder %s39, 0
      %p272 = por %p270, %p271
      %p273 = scmp.ne.s32.totalorder %s265, %s267
      %p274 = scmp.eq.s32.totalorder %s44, 1
      %p275 = por %p273, %p274
      %p276 = scmp.ne.s32.totalorder %s267, %s268
      %p277 = scmp.eq.s32.totalorder %s44, 0
      %p278 = por %p276, %p277
      %p279 = scmp.ne.s32.totalorder %s267, %s268
      %p280 = scmp.eq.s32.totalorder %s45, 1
      %p281 = por %p279, %p280
      %p283 = scmp.ne.s32.totalorder %s268, %s282
      %p284 = scmp.eq.s32.totalorder %s45, 0
      %p285 = por %p283, %p284
      %s287 = sadd.s32 %s286, 1
      %p290 = scmp.eq.s32.totalorder %s39, 1
      %p291 = scmp.ne.s32.totalorder %s286, %s288
      %p292 = scmp.eq.s32.totalorder %s39, 0
      %p293 = por %p291, %p292
      %p294 = scmp.ne.s32.totalorder %s286, %s288
      %p295 = scmp.eq.s32.totalorder %s44, 1
      %p296 = por %p294, %p295
      %p297 = scmp.ne.s32.totalorder %s288, %s289
      %p298 = scmp.eq.s32.totalorder %s44, 0
      %p299 = por %p297, %p298
      %p300 = scmp.ne.s32.totalorder %s288, %s289
      %p301 = scmp.eq.s32.totalorder %s45, 1
      %p302 = por %p300, %p301
      %p304 = scmp.ne.s32.totalorder %s289, %s303
      %p305 = scmp.eq.s32.totalorder %s45, 0
      %p306 = por %p304, %p305
      %s308 = sadd.s32 %s307, 1
      %p311 = scmp.eq.s32.totalorder %s39, 1
      %p312 = scmp.ne.s32.totalorder %s307, %s309
      %p313 = scmp.eq.s32.totalorder %s39, 0
      %p314 = por %p312, %p313
      %p315 = scmp.ne.s32.totalorder %s307, %s309
      %p316 = scmp.eq.s32.totalorder %s44, 1
      %p317 = por %p315, %p316
      %p318 = scmp.ne.s32.totalorder %s309, %s310
      %p319 = scmp.eq.s32.totalorder %s44, 0
      %p320 = por %p318, %p319
      %p321 = scmp.ne.s32.totalorder %s309, %s310
      %p322 = scmp.eq.s32.totalorder %s45, 1
      %p323 = por %p321, %p322
      %p325 = scmp.ne.s32.totalorder %s310, %s324
      %p326 = scmp.eq.s32.totalorder %s45, 0
      %p327 = por %p325, %p326
      %s329 = sadd.s32 %s328, 1
      %p332 = scmp.eq.s32.totalorder %s39, 1
      %p333 = scmp.ne.s32.totalorder %s328, %s330
      %p334 = scmp.eq.s32.totalorder %s39, 0
      %p335 = por %p333, %p334
      %p336 = scmp.ne.s32.totalorder %s328, %s330
      %p337 = scmp.eq.s32.totalorder %s44, 1
      %p338 = por %p336, %p337
      %p339 = scmp.ne.s32.totalorder %s330, %s331
      %p340 = scmp.eq.s32.totalorder %s44, 0
      %p341 = por %p339, %p340
      %p342 = scmp.ne.s32.totalorder %s330, %s331
      %p343 = scmp.eq.s32.totalorder %s45, 1
      %p344 = por %p342, %p343
      %p346 = scmp.ne.s32.totalorder %s331, %s345
      %p347 = scmp.eq.s32.totalorder %s45, 0
      %p348 = por %p346, %p347
      %s350 = sadd.s32 %s349, 1
      %p353 = scmp.eq.s32.totalorder %s39, 1
      %p354 = scmp.ne.s32.totalorder %s349, %s351
      %p355 = scmp.eq.s32.totalorder %s39, 0
      %p356 = por %p354, %p355
      %p357 = scmp.ne.s32.totalorder %s349, %s351
      %p358 = scmp.eq.s32.totalorder %s44, 1
      %p359 = por %p357, %p358
      %p360 = scmp.ne.s32.totalorder %s351, %s352
      %p361 = scmp.eq.s32.totalorder %s44, 0
      %p362 = por %p360, %p361
      %p363 = scmp.ne.s32.totalorder %s351, %s352
      %p364 = scmp.eq.s32.totalorder %s45, 1
      %p365 = por %p363, %p364
      %p367 = scmp.ne.s32.totalorder %s352, %s366
      %p368 = scmp.eq.s32.totalorder %s45, 0
      %p369 = por %p367, %p368
      %s371 = sadd.s32 %s370, 1
      %p374 = scmp.eq.s32.totalorder %s39, 1
      %p375 = scmp.ne.s32.totalorder %s370, %s372
      %p376 = scmp.eq.s32.totalorder %s39, 0
      %p377 = por %p375, %p376
      %p378 = scmp.ne.s32.totalorder %s370, %s372
      %p379 = scmp.eq.s32.totalorder %s44, 1
      %p380 = por %p378, %p379
      %p381 = scmp.ne.s32.totalorder %s372, %s373
      %p382 = scmp.eq.s32.totalorder %s44, 0
      %p383 = por %p381, %p382
      %p384 = scmp.ne.s32.totalorder %s372, %s373
      %p385 = scmp.eq.s32.totalorder %s45, 1
      %p386 = por %p384, %p385
      %p388 = scmp.ne.s32.totalorder %s373, %s387
      %p389 = scmp.eq.s32.totalorder %s45, 0
      %p390 = por %p388, %p389
      %s392 = sadd.s32 %s391, 1
      %p395 = scmp.eq.s32.totalorder %s39, 1
      %p396 = scmp.ne.s32.totalorder %s391, %s393
      %p397 = scmp.eq.s32.totalorder %s39, 0
      %p398 = por %p396, %p397
      %p399 = scmp.ne.s32.totalorder %s391, %s393
      %p400 = scmp.eq.s32.totalorder %s44, 1
      %p401 = por %p399, %p400
      %p402 = scmp.ne.s32.totalorder %s393, %s394
      %p403 = scmp.eq.s32.totalorder %s44, 0
      %p404 = por %p402, %p403
      %p405 = scmp.ne.s32.totalorder %s393, %s394
      %p406 = scmp.eq.s32.totalorder %s45, 1
      %p407 = por %p405, %p406
      %p409 = scmp.ne.s32.totalorder %s394, %s408
      %p410 = scmp.eq.s32.totalorder %s45, 0
      %p411 = por %p409, %p410
      %s413 = sadd.s32 %s412, 1
      %p416 = scmp.eq.s32.totalorder %s39, 1
      %p417 = scmp.ne.s32.totalorder %s412, %s414
      %p418 = scmp.eq.s32.totalorder %s39, 0
      %p419 = por %p417, %p418
      %p420 = scmp.ne.s32.totalorder %s412, %s414
      %p421 = scmp.eq.s32.totalorder %s44, 1
      %p422 = por %p420, %p421
      %p423 = scmp.ne.s32.totalorder %s414, %s415
      %p424 = scmp.eq.s32.totalorder %s44, 0
      %p425 = por %p423, %p424
      %p426 = scmp.ne.s32.totalorder %s414, %s415
      %p427 = scmp.eq.s32.totalorder %s45, 1
      %p428 = por %p426, %p427
      %p430 = scmp.ne.s32.totalorder %s415, %s429
      %p431 = scmp.eq.s32.totalorder %s45, 0
      %p432 = por %p430, %p431
      %s433 = ssub.s32 %s46, %s58
      %s434 = ssub.s32 %s47, %s54
      %s435 = sor.u32 %s433, %s434
      %p436 = scmp.eq.s32.totalorder %s435, 0
      %s438 = sadd.s32 %s437, 1
      %s439 = scalar_select %p436, %s437, %s438
      %p442 = pneg %p436
      %p443 = scmp.eq.s32.totalorder %s39, 1
      %p444 = por %p442, %p443
      %p445 = scmp.ne.s32.totalorder %s437, %s440
      %p446 = scmp.eq.s32.totalorder %s39, 0
      %p447 = por %p445, %p446
      %p448 = scmp.ne.s32.totalorder %s437, %s440
      %p449 = scmp.eq.s32.totalorder %s44, 1
      %p450 = por %p448, %p449
      %p451 = scmp.ne.s32.totalorder %s440, %s441
      %p452 = scmp.eq.s32.totalorder %s44, 0
      %p453 = por %p451, %p452
      %p454 = scmp.ne.s32.totalorder %s440, %s441
      %p455 = scmp.eq.s32.totalorder %s45, 1
      %p456 = por %p454, %p455
      %p458 = scmp.ne.s32.totalorder %s441, %s457
      %p459 = scmp.eq.s32.totalorder %s45, 0
      %p460 = por %p458, %p459
      %p461 = scmp.le.s32.totalorder 1, %s39
      %p462 = scmp.lt.s32.totalorder %s39, 3
      %p463 = pnand %p461, %p462
      %p464 = pneg %p463
      // Predicated region
      $region9: #{tpu_custom_call.1} parent=5 // pred_check
        _
      $region10: #{tpu_custom_call.1} parent=5 // pred_check_branch
        %466 = sbr.rel (%p463) target = $region12
      $region11: #{tpu_custom_call.1} parent=5 // pred_region
        %s467 = ssub.s32 %s39, 1
        // Predicated region
        $region13: #{tpu_custom_call.1} parent=11 // pred_check
          %p468 = pneg %p152
        $region14: #{tpu_custom_call.1} parent=11 // pred_check_branch
          %470 = sbr.rel (%p468) target = $region16
        $region15: #{tpu_custom_call.1} parent=11 // pred_region
          %s472 = ssub.s32 256, 256
          %473 = vsyncadd [#allocation10], %s472
          %s474 = sshll.u32 [#allocation9], 4
          %s475 = int_to_ptr.vmem [resolvable:$true] %s474
          %480 = dma.hbm_to_vmem [thread:$0]  %s3, 256, %s475, [#allocation10], 64, 64, 4
        $region16: #{tpu_custom_call.1} parent=11 // pred_fallthru
          _
        // Predicated region
        $region17: #{tpu_custom_call.1} parent=11 // pred_check
          %p481 = pneg %p173
        $region18: #{tpu_custom_call.1} parent=11 // pred_check_branch
          %483 = sbr.rel (%p481) target = $region20
        $region19: #{tpu_custom_call.1} parent=11 // pred_region
          %s485 = ssub.s32 16, 16
          %486 = vsyncadd [#allocation10], %s485
          %s488 = sshll.u32 [#allocation11], 4
          %s489 = int_to_ptr.vmem [resolvable:$true] %s488
          %491 = dma.hbm_to_vmem [thread:$0]  %s4, 16, %s489, [#allocation10]
        $region20: #{tpu_custom_call.1} parent=11 // pred_fallthru
          _
        // Predicated region
        $region21: #{tpu_custom_call.1} parent=11 // pred_check
          %p492 = pneg %p194
        $region22: #{tpu_custom_call.1} parent=11 // pred_check_branch
          %494 = sbr.rel (%p492) target = $region24
        $region23: #{tpu_custom_call.1} parent=11 // pred_region
          %s496 = ssub.s32 256, 256
          %497 = vsyncadd [#allocation13], %s496
          %s498 = sshll.u32 [#allocation12], 4
          %s499 = int_to_ptr.vmem [resolvable:$true] %s498
          %504 = dma.hbm_to_vmem [thread:$0]  %s5, 256, %s499, [#allocation13], 64, 64, 4
        $region24: #{tpu_custom_call.1} parent=11 // pred_fallthru
          _
        // Predicated region
        $region25: #{tpu_custom_call.1} parent=11 // pred_check
          %p505 = pneg %p215
        $region26: #{tpu_custom_call.1} parent=11 // pred_check_branch
          %507 = sbr.rel (%p505) target = $region28
        $region27: #{tpu_custom_call.1} parent=11 // pred_region
          %s509 = ssub.s32 16, 16
          %510 = vsyncadd [#allocation13], %s509
          %s512 = sshll.u32 [#allocation14], 4
          %s513 = int_to_ptr.vmem [resolvable:$true] %s512
          %515 = dma.hbm_to_vmem [thread:$0]  %s6, 16, %s513, [#allocation13]
        $region28: #{tpu_custom_call.1} parent=11 // pred_fallthru
          _
        // Predicated region
        $region29: #{tpu_custom_call.1} parent=11 // pred_check
          %p516 = pneg %p236
        $region30: #{tpu_custom_call.1} parent=11 // pred_check_branch
          %518 = sbr.rel (%p516) target = $region32
        $region31: #{tpu_custom_call.1} parent=11 // pred_region
          %s520 = ssub.s32 256, 256
          %521 = vsyncadd [#allocation16], %s520
          %s522 = sshll.u32 [#allocation15], 4
          %s523 = int_to_ptr.vmem [resolvable:$true] %s522
          %528 = dma.hbm_to_vmem [thread:$0]  %s7, 256, %s523, [#allocation16], 64, 64, 4
        $region32: #{tpu_custom_call.1} parent=11 // pred_fallthru
          _
        // Predicated region
        $region33: #{tpu_custom_call.1} parent=11 // pred_check
          %p529 = pneg %p257
        $region34: #{tpu_custom_call.1} parent=11 // pred_check_branch
          %531 = sbr.rel (%p529) target = $region36
        $region35: #{tpu_custom_call.1} parent=11 // pred_region
          %s533 = ssub.s32 16, 16
          %534 = vsyncadd [#allocation16], %s533
          %s536 = sshll.u32 [#allocation17], 4
          %s537 = int_to_ptr.vmem [resolvable:$true] %s536
          %539 = dma.hbm_to_vmem [thread:$0]  %s8, 16, %s537, [#allocation16]
        $region36: #{tpu_custom_call.1} parent=11 // pred_fallthru
          _
        // Predicated region
        $region37: #{tpu_custom_call.1} parent=11 // pred_check
          %p540 = pneg %p278
        $region38: #{tpu_custom_call.1} parent=11 // pred_check_branch
          %542 = sbr.rel (%p540) target = $region40
        $region39: #{tpu_custom_call.1} parent=11 // pred_region
          %s544 = ssub.s32 16, 16
          %545 = vsyncadd [#allocation19], %s544
          %s547 = sshll.u32 [#allocation18], 4
          %s548 = int_to_ptr.vmem [resolvable:$true] %s547
          %550 = dma.hbm_to_vmem [thread:$0]  %s9, 16, %s548, [#allocation19]
        $region40: #{tpu_custom_call.1} parent=11 // pred_fallthru
          _
        // Predicated region
        $region41: #{tpu_custom_call.1} parent=11 // pred_check
          %p551 = pneg %p299
        $region42: #{tpu_custom_call.1} parent=11 // pred_check_branch
          %553 = sbr.rel (%p551) target = $region44
        $region43: #{tpu_custom_call.1} parent=11 // pred_region
          %s555 = ssub.s32 16, 16
          %556 = vsyncadd [#allocation19], %s555
          %s558 = sshll.u32 [#allocation20], 4
          %s559 = int_to_ptr.vmem [resolvable:$true] %s558
          %561 = dma.hbm_to_vmem [thread:$0]  %s10, 16, %s559, [#allocation19]
        $region44: #{tpu_custom_call.1} parent=11 // pred_fallthru
          _
        // Predicated region
        $region45: #{tpu_custom_call.1} parent=11 // pred_check
          %p562 = pneg %p320
        $region46: #{tpu_custom_call.1} parent=11 // pred_check_branch
          %564 = sbr.rel (%p562) target = $region48
        $region47: #{tpu_custom_call.1} parent=11 // pred_region
          %s566 = ssub.s32 256, 256
          %567 = vsyncadd [#allocation22], %s566
          %s568 = sshll.u32 [#allocation21], 4
          %s569 = int_to_ptr.vmem [resolvable:$true] %s568
          %574 = dma.hbm_to_vmem [thread:$0]  %s11, 256, %s569, [#allocation22], 64, 64, 4
        $region48: #{tpu_custom_call.1} parent=11 // pred_fallthru
          _
        // Predicated region
        $region49: #{tpu_custom_call.1} parent=11 // pred_check
          %p575 = pneg %p341
        $region50: #{tpu_custom_call.1} parent=11 // pred_check_branch
          %577 = sbr.rel (%p575) target = $region52
        $region51: #{tpu_custom_call.1} parent=11 // pred_region
          %s579 = ssub.s32 16, 16
          %580 = vsyncadd [#allocation22], %s579
          %s582 = sshll.u32 [#allocation23], 4
          %s583 = int_to_ptr.vmem [resolvable:$true] %s582
          %585 = dma.hbm_to_vmem [thread:$0]  %s12, 16, %s583, [#allocation22]
        $region52: #{tpu_custom_call.1} parent=11 // pred_fallthru
          _
        // Predicated region
        $region53: #{tpu_custom_call.1} parent=11 // pred_check
          %p586 = pneg %p362
        $region54: #{tpu_custom_call.1} parent=11 // pred_check_branch
          %588 = sbr.rel (%p586) target = $region56
        $region55: #{tpu_custom_call.1} parent=11 // pred_region
          %s590 = ssub.s32 1024, 1024
          %591 = vsyncadd [#allocation25], %s590
          %s592 = sshll.u32 [#allocation24], 4
          %s593 = int_to_ptr.vmem [resolvable:$true] %s592
          %598 = dma.hbm_to_vmem [thread:$0]  %s13, 1024, %s593, [#allocation25], 64, 64, 4
        $region56: #{tpu_custom_call.1} parent=11 // pred_fallthru
          _
        // Predicated region
        $region57: #{tpu_custom_call.1} parent=11 // pred_check
          %p599 = pneg %p383
        $region58: #{tpu_custom_call.1} parent=11 // pred_check_branch
          %601 = sbr.rel (%p599) target = $region60
        $region59: #{tpu_custom_call.1} parent=11 // pred_region
          %s603 = ssub.s32 16, 16
          %604 = vsyncadd [#allocation25], %s603
          %s606 = sshll.u32 [#allocation26], 4
          %s607 = int_to_ptr.vmem [resolvable:$true] %s606
          %609 = dma.hbm_to_vmem [thread:$0]  %s14, 16, %s607, [#allocation25]
        $region60: #{tpu_custom_call.1} parent=11 // pred_fallthru
          _
        // Predicated region
        $region61: #{tpu_custom_call.1} parent=11 // pred_check
          %p610 = pneg %p404
        $region62: #{tpu_custom_call.1} parent=11 // pred_check_branch
          %612 = sbr.rel (%p610) target = $region64
        $region63: #{tpu_custom_call.1} parent=11 // pred_region
          %s614 = ssub.s32 16, 16
          %615 = vsyncadd [#allocation28], %s614
          %s617 = sshll.u32 [#allocation27], 4
          %s618 = int_to_ptr.vmem [resolvable:$true] %s617
          %620 = dma.hbm_to_vmem [thread:$0]  %s15, 16, %s618, [#allocation28]
        $region64: #{tpu_custom_call.1} parent=11 // pred_fallthru
          _
        // Predicated region
        $region65: #{tpu_custom_call.1} parent=11 // pred_check
          %p621 = pneg %p425
        $region66: #{tpu_custom_call.1} parent=11 // pred_check_branch
          %623 = sbr.rel (%p621) target = $region68
        $region67: #{tpu_custom_call.1} parent=11 // pred_region
          %s625 = ssub.s32 16, 16
          %626 = vsyncadd [#allocation28], %s625
          %s628 = sshll.u32 [#allocation29], 4
          %s629 = int_to_ptr.vmem [resolvable:$true] %s628
          %631 = dma.hbm_to_vmem [thread:$0]  %s16, 16, %s629, [#allocation28]
        $region68: #{tpu_custom_call.1} parent=11 // pred_fallthru
          _
      $region12: #{tpu_custom_call.1} parent=5 // pred_fallthru
        _
      %p632 = scmp.lt.s32.totalorder %s39, 2
      // Predicated region
      $region69: #{tpu_custom_call.1} parent=5 // pred_check
        %p633 = pneg %p632
      $region70: #{tpu_custom_call.1} parent=5 // pred_check_branch
        %635 = sbr.rel (%p633) target = $region72
      $region71: #{tpu_custom_call.1} parent=5 // pred_region
        // Predicated region
        $region73: #{tpu_custom_call.1} parent=71 // pred_check
          %p636 = pneg %p73
        $region74: #{tpu_custom_call.1} parent=71 // pred_check_branch
          %638 = sbr.rel (%p636) target = $region76
        $region75: #{tpu_custom_call.1} parent=71 // pred_region
          %s639 = sand.u32 %s63, 1
          %s640 = scalar_lea.sflag [#allocation4], %s639
          %s641 = sand.u32 %s63, 1
          %s642 = smul.addr %s641, 8
          %s643 = scalar_lea.vmem [#allocation3], %s642
          %s645 = ssub.s32 128, 128
          %646 = vsyncadd %s640, %s645
          %s647 = sadd.s32 %s47, %s46
          %s648 = smul.addr %s647, 128
          %s649 = scalar_lea.hbm %s0, %s648
          %s651 = sshll.u32 %s643, 4
          %s652 = int_to_ptr.vmem [resolvable:$true] %s651
          %654 = dma.hbm_to_vmem [thread:$0]  %s649, 128, %s652, %s640
        $region76: #{tpu_custom_call.1} parent=71 // pred_fallthru
          _
        // Predicated region
        $region77: #{tpu_custom_call.1} parent=71 // pred_check
          %p655 = pneg %p99
        $region78: #{tpu_custom_call.1} parent=71 // pred_check_branch
          %657 = sbr.rel (%p655) target = $region80
        $region79: #{tpu_custom_call.1} parent=71 // pred_region
          %s658 = sand.u32 %s39, 1
          %s659 = scalar_lea.sflag [#allocation7], %s658
          %s660 = sand.u32 %s89, 1
          %s661 = smul.addr %s660, 8
          %s662 = scalar_lea.vmem [#allocation6], %s661
          %s664 = ssub.s32 128, 128
          %665 = vsyncadd %s659, %s664
          %s666 = smul.addr %s46, 128
          %s667 = scalar_lea.hbm %s1, %s666
          %s669 = sshll.u32 %s662, 4
          %s670 = int_to_ptr.vmem [resolvable:$true] %s669
          %672 = dma.hbm_to_vmem [thread:$0]  %s667, 128, %s670, %s659
        $region80: #{tpu_custom_call.1} parent=71 // pred_fallthru
          _
        // Predicated region
        $region81: #{tpu_custom_call.1} parent=71 // pred_check
          %p673 = pneg %p125
        $region82: #{tpu_custom_call.1} parent=71 // pred_check_branch
          %675 = sbr.rel (%p673) target = $region84
        $region83: #{tpu_custom_call.1} parent=71 // pred_region
          %s676 = sand.u32 %s39, 1
          %s677 = scalar_lea.sflag [#allocation7], %s676
          %s678 = sand.u32 %s115, 1
          %s679 = scalar_lea.vmem [#allocation8], %s678
          %s681 = ssub.s32 16, 16
          %682 = vsyncadd %s677, %s681
          %s683 = smul.addr %s46, 16
          %s684 = scalar_lea.hbm %s2, %s683
          %s686 = sshll.u32 %s679, 4
          %s687 = int_to_ptr.vmem [resolvable:$true] %s686
          %689 = dma.hbm_to_vmem [thread:$0]  %s684, 16, %s687, %s677
        $region84: #{tpu_custom_call.1} parent=71 // pred_fallthru
          _
      $region72: #{tpu_custom_call.1} parent=5 // pred_fallthru
        _
      %p690 = scmp.le.s32.totalorder 1, %s39
      %p691 = scmp.lt.s32.totalorder %s39, 3
      %p692 = pnand %p690, %p691
      %p693 = pneg %p692
      // Predicated region
      $region85: #{tpu_custom_call.1} parent=5 // pred_check
        _
      $region86: #{tpu_custom_call.1} parent=5 // pred_check_branch
        %695 = sbr.rel (%p692) target = $region88
      $region87: #{tpu_custom_call.1} parent=5 // pred_region
        %s696 = ssub.s32 %s39, 1
        %s697 = sand.u32 %s66, 1
        %s698 = scalar_lea.sflag [#allocation4], %s697
        %s699 = sand.u32 %s66, 1
        %s700 = smul.addr %s699, 8
        %s701 = scalar_lea.vmem [#allocation3], %s700
        // Predicated region
        $region89: #{tpu_custom_call.1} parent=87 // pred_check
          %p702 = pneg %p79
        $region90: #{tpu_custom_call.1} parent=87 // pred_check_branch
          %704 = sbr.rel (%p702) target = $region92
        $region91: #{tpu_custom_call.1} parent=87 // pred_region
          %705 = dma.done %s698, 128
        $region92: #{tpu_custom_call.1} parent=87 // pred_fallthru
          _
        %s706 = sand.u32 %s44, 1
        %s707 = scalar_lea.sflag [#allocation7], %s706
        %s708 = sand.u32 %s92, 1
        %s709 = smul.addr %s708, 8
        %s710 = scalar_lea.vmem [#allocation6], %s709
        // Predicated region
        $region93: #{tpu_custom_call.1} parent=87 // pred_check
          %p711 = pneg %p105
        $region94: #{tpu_custom_call.1} parent=87 // pred_check_branch
          %713 = sbr.rel (%p711) target = $region96
        $region95: #{tpu_custom_call.1} parent=87 // pred_region
          %714 = dma.done %s707, 128
        $region96: #{tpu_custom_call.1} parent=87 // pred_fallthru
          _
        %s715 = sand.u32 %s44, 1
        %s716 = scalar_lea.sflag [#allocation7], %s715
        %s717 = sand.u32 %s118, 1
        %s718 = scalar_lea.vmem [#allocation8], %s717
        // Predicated region
        $region97: #{tpu_custom_call.1} parent=87 // pred_check
          %p719 = pneg %p131
        $region98: #{tpu_custom_call.1} parent=87 // pred_check_branch
          %721 = sbr.rel (%p719) target = $region100
        $region99: #{tpu_custom_call.1} parent=87 // pred_region
          %722 = dma.done %s716, 16
        $region100: #{tpu_custom_call.1} parent=87 // pred_fallthru
          _
        // Predicated region
        $region101: #{tpu_custom_call.1} parent=87 // pred_check
          %p723 = pneg %p152
        $region102: #{tpu_custom_call.1} parent=87 // pred_check_branch
          %725 = sbr.rel (%p723) target = $region104
        $region103: #{tpu_custom_call.1} parent=87 // pred_region
          %726 = dma.done [#allocation10], 256
        $region104: #{tpu_custom_call.1} parent=87 // pred_fallthru
          _
        // Predicated region
        $region105: #{tpu_custom_call.1} parent=87 // pred_check
          %p727 = pneg %p173
        $region106: #{tpu_custom_call.1} parent=87 // pred_check_branch
          %729 = sbr.rel (%p727) target = $region108
        $region107: #{tpu_custom_call.1} parent=87 // pred_region
          %730 = dma.done [#allocation10], 16
        $region108: #{tpu_custom_call.1} parent=87 // pred_fallthru
          _
        // Predicated region
        $region109: #{tpu_custom_call.1} parent=87 // pred_check
          %p731 = pneg %p194
        $region110: #{tpu_custom_call.1} parent=87 // pred_check_branch
          %733 = sbr.rel (%p731) target = $region112
        $region111: #{tpu_custom_call.1} parent=87 // pred_region
          %734 = dma.done [#allocation13], 256
        $region112: #{tpu_custom_call.1} parent=87 // pred_fallthru
          _
        // Predicated region
        $region113: #{tpu_custom_call.1} parent=87 // pred_check
          %p735 = pneg %p215
        $region114: #{tpu_custom_call.1} parent=87 // pred_check_branch
          %737 = sbr.rel (%p735) target = $region116
        $region115: #{tpu_custom_call.1} parent=87 // pred_region
          %738 = dma.done [#allocation13], 16
        $region116: #{tpu_custom_call.1} parent=87 // pred_fallthru
          _
        // Predicated region
        $region117: #{tpu_custom_call.1} parent=87 // pred_check
          %p739 = pneg %p236
        $region118: #{tpu_custom_call.1} parent=87 // pred_check_branch
          %741 = sbr.rel (%p739) target = $region120
        $region119: #{tpu_custom_call.1} parent=87 // pred_region
          %742 = dma.done [#allocation16], 256
        $region120: #{tpu_custom_call.1} parent=87 // pred_fallthru
          _
        // Predicated region
        $region121: #{tpu_custom_call.1} parent=87 // pred_check
          %p743 = pneg %p257
        $region122: #{tpu_custom_call.1} parent=87 // pred_check_branch
          %745 = sbr.rel (%p743) target = $region124
        $region123: #{tpu_custom_call.1} parent=87 // pred_region
          %746 = dma.done [#allocation16], 16
        $region124: #{tpu_custom_call.1} parent=87 // pred_fallthru
          _
        // Predicated region
        $region125: #{tpu_custom_call.1} parent=87 // pred_check
          %p747 = pneg %p278
        $region126: #{tpu_custom_call.1} parent=87 // pred_check_branch
          %749 = sbr.rel (%p747) target = $region128
        $region127: #{tpu_custom_call.1} parent=87 // pred_region
          %750 = dma.done [#allocation19], 16
        $region128: #{tpu_custom_call.1} parent=87 // pred_fallthru
          _
        // Predicated region
        $region129: #{tpu_custom_call.1} parent=87 // pred_check
          %p751 = pneg %p299
        $region130: #{tpu_custom_call.1} parent=87 // pred_check_branch
          %753 = sbr.rel (%p751) target = $region132
        $region131: #{tpu_custom_call.1} parent=87 // pred_region
          %754 = dma.done [#allocation19], 16
        $region132: #{tpu_custom_call.1} parent=87 // pred_fallthru
          _
        // Predicated region
        $region133: #{tpu_custom_call.1} parent=87 // pred_check
          %p755 = pneg %p320
        $region134: #{tpu_custom_call.1} parent=87 // pred_check_branch
          %757 = sbr.rel (%p755) target = $region136
        $region135: #{tpu_custom_call.1} parent=87 // pred_region
          %758 = dma.done [#allocation22], 256
        $region136: #{tpu_custom_call.1} parent=87 // pred_fallthru
          _
        // Predicated region
        $region137: #{tpu_custom_call.1} parent=87 // pred_check
          %p759 = pneg %p341
        $region138: #{tpu_custom_call.1} parent=87 // pred_check_branch
          %761 = sbr.rel (%p759) target = $region140
        $region139: #{tpu_custom_call.1} parent=87 // pred_region
          %762 = dma.done [#allocation22], 16
        $region140: #{tpu_custom_call.1} parent=87 // pred_fallthru
          _
        // Predicated region
        $region141: #{tpu_custom_call.1} parent=87 // pred_check
          %p763 = pneg %p362
        $region142: #{tpu_custom_call.1} parent=87 // pred_check_branch
          %765 = sbr.rel (%p763) target = $region144
        $region143: #{tpu_custom_call.1} parent=87 // pred_region
          %766 = dma.done [#allocation25], 1024
        $region144: #{tpu_custom_call.1} parent=87 // pred_fallthru
          _
        // Predicated region
        $region145: #{tpu_custom_call.1} parent=87 // pred_check
          %p767 = pneg %p383
        $region146: #{tpu_custom_call.1} parent=87 // pred_check_branch
          %769 = sbr.rel (%p767) target = $region148
        $region147: #{tpu_custom_call.1} parent=87 // pred_region
          %770 = dma.done [#allocation25], 16
        $region148: #{tpu_custom_call.1} parent=87 // pred_fallthru
          _
        // Predicated region
        $region149: #{tpu_custom_call.1} parent=87 // pred_check
          %p771 = pneg %p404
        $region150: #{tpu_custom_call.1} parent=87 // pred_check_branch
          %773 = sbr.rel (%p771) target = $region152
        $region151: #{tpu_custom_call.1} parent=87 // pred_region
          %774 = dma.done [#allocation28], 16
        $region152: #{tpu_custom_call.1} parent=87 // pred_fallthru
          _
        // Predicated region
        $region153: #{tpu_custom_call.1} parent=87 // pred_check
          %p775 = pneg %p425
        $region154: #{tpu_custom_call.1} parent=87 // pred_check_branch
          %777 = sbr.rel (%p775) target = $region156
        $region155: #{tpu_custom_call.1} parent=87 // pred_region
          %778 = dma.done [#allocation28], 16
        $region156: #{tpu_custom_call.1} parent=87 // pred_fallthru
          _
        %s779 = sand.u32 %s66, 1
        %s780 = scalar_lea.sflag [#allocation4], %s779
        %s781 = sand.u32 %s66, 1
        %s782 = smul.addr %s781, 8
        %s783 = scalar_lea.vmem [#allocation3], %s782
        %p784 = pneg %p79
        %p785 = pneg %p76
        %s786 = sand.u32 %s44, 1
        %s787 = scalar_lea.sflag [#allocation7], %s786
        %s788 = sand.u32 %s92, 1
        %s789 = smul.addr %s788, 8
        %s790 = scalar_lea.vmem [#allocation6], %s789
        %p791 = pneg %p105
        %p792 = pneg %p102
        %s793 = sand.u32 %s44, 1
        %s794 = scalar_lea.sflag [#allocation7], %s793
        %s795 = sand.u32 %s118, 1
        %s796 = scalar_lea.vmem [#allocation8], %s795
        %p797 = pneg %p131
        %p798 = pneg %p128
        %p799 = pneg %p152
        %p800 = pneg %p149
        %p801 = pneg %p173
        %p802 = pneg %p170
        %p803 = pneg %p194
        %p804 = pneg %p191
        %p805 = pneg %p215
        %p806 = pneg %p212
        %p807 = pneg %p236
        %p808 = pneg %p233
        %p809 = pneg %p257
        %p810 = pneg %p254
        %p811 = pneg %p278
        %p812 = pneg %p275
        %p813 = pneg %p299
        %p814 = pneg %p296
        %p815 = pneg %p320
        %p816 = pneg %p317
        %p817 = pneg %p341
        %p818 = pneg %p338
        %p819 = pneg %p362
        %p820 = pneg %p359
        %p821 = pneg %p383
        %p822 = pneg %p380
        %p823 = pneg %p404
        %p824 = pneg %p401
        %p825 = pneg %p425
        %p826 = pneg %p422
        %p827 = pneg %p453
        %p828 = pneg %p450
        %s829 = sand.u32 %s440, 1
        %s830 = scalar_lea.sflag [#allocation5], %s829
        %s831 = sand.u32 %s440, 1
        %s832 = smul.addr %s831, 8
        %s833 = scalar_lea.vmem [#allocation30], %s832
        %v835 = vld [vmem:[%s701] sm:$0xff]
        %v836 = vpack.c.bf16 %v835, %v835
        %v837 = vld [vmem:[#allocation9] sm:$0xf]
        %v838 = vld [vmem:[#allocation9 + $0x4] sm:$0xf]
        %v839 = vld [vmem:[#allocation9 + $0x8] sm:$0xf]
        %v840 = vld [vmem:[#allocation9 + $0xc] sm:$0xf]
        %v841 = vld [vmem:[#allocation11] sm:$0x1]
        %v843 = vlaneseq
        %v844 = vshrl.u32 %v843, 7
        %v845 = vsub.s32 0, %v844
        %v846 = vrot.slane %v841, %v845
        %v852 = vunpack.c.l.b16 %v837
        %v853 = vunpack.c.l.b16 %v838
        %v854 = vunpack.c.l.b16 %v839
        %v855 = vunpack.c.l.b16 %v840
        %v856 = vpack.c.b16 %v853, %v852
        %v857 = vpack.c.b16 %v855, %v854
        %vm860 = vcmask 261120
        %v862 = vsel %vm860, %v836, 0
        %864 = vmatprep.subr.bf16.mxu0 0
        %865 = vmatpush1.bf16.msra.mxu0 %v856
        %866 = vmatprep.subr.bf16.mxu0 0
        %867 = vmatpush1.bf16.msra.mxu0 %v857
        %868 = vmatprep.subr.bf16.mxu0 0
        %869 = vmatpush1.bf16.msra.mxu0 0
        %870 = vmatprep.subr.bf16.mxu0 0
        %871 = vmatpush1.bf16.msra.mxu0 0
        %872 = vmatprep.subr.bf16.mxu0 0
        %873 = vmatpush1.bf16.msra.mxu0 0
        %874 = vmatprep.subr.bf16.mxu0 0
        %875 = vmatpush1.bf16.msra.mxu0 0
        %876 = vmatprep.subr.bf16.mxu0 0
        %877 = vmatpush1.bf16.msra.mxu0 0
        %878 = vmatprep.subr.bf16.mxu0 0
        %879 = vmatpush1.bf16.msra.mxu0 0
        %880 = vmatprep.subr.bf16.mxu0 0
        %881 = vmatpush1.bf16.msra.mxu0 0
        %882 = vmatprep.subr.bf16.mxu0 0
        %883 = vmatpush1.bf16.msra.mxu0 0
        %884 = vmatprep.subr.bf16.mxu0 0
        %885 = vmatpush1.bf16.msra.mxu0 0
        %886 = vmatprep.subr.bf16.mxu0 0
        %887 = vmatpush1.bf16.msra.mxu0 0
        %888 = vmatprep.subr.bf16.mxu0 0
        %889 = vmatpush1.bf16.msra.mxu0 0
        %890 = vmatprep.subr.bf16.mxu0 0
        %891 = vmatpush1.bf16.msra.mxu0 0
        %892 = vmatprep.subr.bf16.mxu0 0
        %893 = vmatpush1.bf16.msra.mxu0 0
        %894 = vmatprep.subr.bf16.mxu0 0
        %895 = vmatpush1.bf16.msra.mxu0 0
        %896 = vmatprep.mubr.bf16.mxu0 0
        %897 = vmatmul.mubr.bf16.gmra.mrb[0].mxu0 %v862
        %v898 = vpop.f32.mrb[0].mxu0
        %v899 = vadd.f32 %v846, %v898
        %v900 = vpop.f32.mrb[0].mxu0
        %v901 = vpop.f32.mrb[0].mxu0
        %v902 = vpop.f32.mrb[0].mxu0
        %903 = vdwg.mxu0
        %v904 = vld [vmem:[%s710] sm:$0xff]
        %v905 = vpack.c.bf16 %v904, %v904
        %v906 = vld [vmem:[#allocation12] sm:$0xf]
        %v907 = vld [vmem:[#allocation12 + $0x4] sm:$0xf]
        %v908 = vld [vmem:[#allocation12 + $0x8] sm:$0xf]
        %v909 = vld [vmem:[#allocation12 + $0xc] sm:$0xf]
        %v910 = vld [vmem:[#allocation14] sm:$0x1]
        %v912 = vlaneseq
        %v913 = vshrl.u32 %v912, 7
        %v914 = vsub.s32 0, %v913
        %v915 = vrot.slane %v910, %v914
        %v921 = vunpack.c.l.b16 %v906
        %v922 = vunpack.c.l.b16 %v907
        %v923 = vunpack.c.l.b16 %v908
        %v924 = vunpack.c.l.b16 %v909
        %v925 = vpack.c.b16 %v922, %v921
        %v926 = vpack.c.b16 %v924, %v923
        %v930 = vsel %vm860, %v905, 0
        %932 = vmatprep.subr.bf16.mxu0 0
        %933 = vmatpush1.bf16.msra.mxu0 %v925
        %934 = vmatprep.subr.bf16.mxu0 0
        %935 = vmatpush1.bf16.msra.mxu0 %v926
        %936 = vmatprep.subr.bf16.mxu0 0
        %937 = vmatpush1.bf16.msra.mxu0 0
        %938 = vmatprep.subr.bf16.mxu0 0
        %939 = vmatpush1.bf16.msra.mxu0 0
        %940 = vmatprep.subr.bf16.mxu0 0
        %941 = vmatpush1.bf16.msra.mxu0 0
        %942 = vmatprep.subr.bf16.mxu0 0
        %943 = vmatpush1.bf16.msra.mxu0 0
        %944 = vmatprep.subr.bf16.mxu0 0
        %945 = vmatpush1.bf16.msra.mxu0 0
        %946 = vmatprep.subr.bf16.mxu0 0
        %947 = vmatpush1.bf16.msra.mxu0 0
        %948 = vmatprep.subr.bf16.mxu0 0
        %949 = vmatpush1.bf16.msra.mxu0 0
        %950 = vmatprep.subr.bf16.mxu0 0
        %951 = vmatpush1.bf16.msra.mxu0 0
        %952 = vmatprep.subr.bf16.mxu0 0
        %953 = vmatpush1.bf16.msra.mxu0 0
        %954 = vmatprep.subr.bf16.mxu0 0
        %955 = vmatpush1.bf16.msra.mxu0 0
        %956 = vmatprep.subr.bf16.mxu0 0
        %957 = vmatpush1.bf16.msra.mxu0 0
        %958 = vmatprep.subr.bf16.mxu0 0
        %959 = vmatpush1.bf16.msra.mxu0 0
        %960 = vmatprep.subr.bf16.mxu0 0
        %961 = vmatpush1.bf16.msra.mxu0 0
        %962 = vmatprep.subr.bf16.mxu0 0
        %963 = vmatpush1.bf16.msra.mxu0 0
        %964 = vmatprep.mubr.bf16.mxu0 0
        %965 = vmatmul.mubr.bf16.gmra.mrb[0].mxu0 %v930
        %v966 = vpop.f32.mrb[0].mxu0
        %v967 = vadd.f32 %v915, %v966
        %v968 = vpop.f32.mrb[0].mxu0
        %v969 = vpop.f32.mrb[0].mxu0
        %v970 = vpop.f32.mrb[0].mxu0
        %971 = vdwg.mxu0
        %v972 = vld [vmem:[%s718] sm:$0x1]
        %v974 = vlaneseq
        %v975 = vshrl.u32 %v974, 7
        %v976 = vsub.s32 0, %v975
        %v977 = vrot.slane %v972, %v976
        %v979 = vpack.c.bf16 %v899, %v899
        %v980 = vpack.c.bf16 %v967, %v967
        %vm981 = vcmask 64512
        %v983 = vsel %vm981, %v979, 0
        %v986 = vsel %vm981, %v980, 0
        %988 = vmatprep.subr.bf16.mxu0 0
        %989 = vmatpush1.bf16.xpose.msra.mxu0 %v986
        %990 = vmatprep.subr.bf16.mxu0 0
        %991 = vmatpush1.bf16.xpose.msra.mxu0 0
        %992 = vmatprep.subr.bf16.mxu0 0
        %993 = vmatpush1.bf16.xpose.msra.mxu0 0
        %994 = vmatprep.subr.bf16.mxu0 0
        %995 = vmatpush1.bf16.xpose.msra.mxu0 0
        %996 = vmatprep.subr.bf16.mxu0 0
        %997 = vmatpush1.bf16.xpose.msra.mxu0 0
        %998 = vmatprep.subr.bf16.mxu0 0
        %999 = vmatpush1.bf16.xpose.msra.mxu0 0
        %1000 = vmatprep.subr.bf16.mxu0 0
        %1001 = vmatpush1.bf16.xpose.msra.mxu0 0
        %1002 = vmatprep.subr.bf16.mxu0 0
        %1003 = vmatpush1.bf16.xpose.msra.mxu0 0
        %1004 = vmatprep.subr.bf16.mxu0 0
        %1005 = vmatpush1.bf16.xpose.msra.mxu0 0
        %1006 = vmatprep.subr.bf16.mxu0 0
        %1007 = vmatpush1.bf16.xpose.msra.mxu0 0
        %1008 = vmatprep.subr.bf16.mxu0 0
        %1009 = vmatpush1.bf16.xpose.msra.mxu0 0
        %1010 = vmatprep.subr.bf16.mxu0 0
        %1011 = vmatpush1.bf16.xpose.msra.mxu0 0
        %1012 = vmatprep.subr.bf16.mxu0 0
        %1013 = vmatpush1.bf16.xpose.msra.mxu0 0
        %1014 = vmatprep.subr.bf16.mxu0 0
        %1015 = vmatpush1.bf16.xpose.msra.mxu0 0
        %1016 = vmatprep.subr.bf16.mxu0 0
        %1017 = vmatpush1.bf16.xpose.msra.mxu0 0
        %1018 = vmatprep.subr.bf16.mxu0 0
        %1019 = vmatpush1.bf16.xpose.msra.mxu0 0
        %1020 = vmatprep.mubr.bf16.mxu0 0
        %1021 = vmatmul.mubr.bf16.gmra.mrb[0].mxu0 %v983
        %v1022 = vpop.f32.mrb[0].mxu0
        %v1023 = vadd.f32 %v977, %v1022
        %v1024 = vpop.f32.mrb[0].mxu0
        %v1025 = vpop.f32.mrb[0].mxu0
        %v1026 = vpop.f32.mrb[0].mxu0
        %1027 = vdwg.mxu0
        %v1028 = vsel %vm981, %v1023, -inf
        %1029 = vmax.xlane.f32.xlu0 %v1028
        %v1030 = vpop.xlane.xlu0 %1029
        %v1031 = vsub.f32 %v1023, %v1030
        %v1032 = vmul.f32 %v1031, 1.442695
        %v1033 = vpow.pop %v1032
        %v1034 = vsel %vm981, %v1033, 0.0
        %1035 = vadd.xlane.f32.xlu0 %v1034
        %v1036 = vpop.xlane.xlu0 %1035
        %v1037 = vrcp.pop %v1036
        %v1038 = vmul.f32 %v1033, %v1037
        %v1039 = vpack.c.bf16 %v1038, %v1038
        %1041 = vrot.lane.b32.xlu0 %v980, 96
        %v1042 = vpop.permute.xlu0 %1041
        %v1044 = vsel %vm981, %v1039, 0
        %vm1046 = vcmask 1043456
        %v1048 = vsel %vm1046, %v1042, 0
        %1050 = vmatprep.subr.bf16.mxu0 0
        %1051 = vmatpush1.bf16.msra.mxu0 %v1048
        %1052 = vmatprep.subr.bf16.mxu0 0
        %1053 = vmatpush1.bf16.msra.mxu0 0
        %1054 = vmatprep.subr.bf16.mxu0 0
        %1055 = vmatpush1.bf16.msra.mxu0 0
        %1056 = vmatprep.subr.bf16.mxu0 0
        %1057 = vmatpush1.bf16.msra.mxu0 0
        %1058 = vmatprep.subr.bf16.mxu0 0
        %1059 = vmatpush1.bf16.msra.mxu0 0
        %1060 = vmatprep.subr.bf16.mxu0 0
        %1061 = vmatpush1.bf16.msra.mxu0 0
        %1062 = vmatprep.subr.bf16.mxu0 0
        %1063 = vmatpush1.bf16.msra.mxu0 0
        %1064 = vmatprep.subr.bf16.mxu0 0
        %1065 = vmatpush1.bf16.msra.mxu0 0
        %1066 = vmatprep.subr.bf16.mxu0 0
        %1067 = vmatpush1.bf16.msra.mxu0 0
        %1068 = vmatprep.subr.bf16.mxu0 0
        %1069 = vmatpush1.bf16.msra.mxu0 0
        %1070 = vmatprep.subr.bf16.mxu0 0
        %1071 = vmatpush1.bf16.msra.mxu0 0
        %1072 = vmatprep.subr.bf16.mxu0 0
        %1073 = vmatpush1.bf16.msra.mxu0 0
        %1074 = vmatprep.subr.bf16.mxu0 0
        %1075 = vmatpush1.bf16.msra.mxu0 0
        %1076 = vmatprep.subr.bf16.mxu0 0
        %1077 = vmatpush1.bf16.msra.mxu0 0
        %1078 = vmatprep.subr.bf16.mxu0 0
        %1079 = vmatpush1.bf16.msra.mxu0 0
        %1080 = vmatprep.subr.bf16.mxu0 0
        %1081 = vmatpush1.bf16.msra.mxu0 0
        %1082 = vmatprep.mubr.bf16.mxu0 0
        %1083 = vmatmul.mubr.bf16.gmra.mrb[0].mxu0 %v1044
        %v1084 = vpop.f32.mrb[0].mxu0
        %v1085 = vadd.f32 0.0, %v1084
        %v1086 = vpop.f32.mrb[0].mxu0
        %v1087 = vpop.f32.mrb[0].mxu0
        %v1088 = vpop.f32.mrb[0].mxu0
        %1089 = vdwg.mxu0
        %1090 = vst.msk [vmem:[#allocation2] sm:$0xff] %vm981, %v1085
        %1092 = vrot.lane.b32.xlu0 %v979, 120
        %v1093 = vpop.permute.xlu0 %1092
        %1094 = vrot.lane.b32.xlu0 %v980, 120
        %v1095 = vpop.permute.xlu0 %1094
        %v1097 = vsel %vm981, %v1093, 0
        %v1100 = vsel %vm981, %v1095, 0
        %1102 = vmatprep.subr.bf16.mxu0 0
        %1103 = vmatpush1.bf16.xpose.msra.mxu0 %v1100
        %1104 = vmatprep.subr.bf16.mxu0 0
        %1105 = vmatpush1.bf16.xpose.msra.mxu0 0
        %1106 = vmatprep.subr.bf16.mxu0 0
        %1107 = vmatpush1.bf16.xpose.msra.mxu0 0
        %1108 = vmatprep.subr.bf16.mxu0 0
        %1109 = vmatpush1.bf16.xpose.msra.mxu0 0
        %1110 = vmatprep.subr.bf16.mxu0 0
        %1111 = vmatpush1.bf16.xpose.msra.mxu0 0
        %1112 = vmatprep.subr.bf16.mxu0 0
        %1113 = vmatpush1.bf16.xpose.msra.mxu0 0
        %1114 = vmatprep.subr.bf16.mxu0 0
        %1115 = vmatpush1.bf16.xpose.msra.mxu0 0
        %1116 = vmatprep.subr.bf16.mxu0 0
        %1117 = vmatpush1.bf16.xpose.msra.mxu0 0
        %1118 = vmatprep.subr.bf16.mxu0 0
        %1119 = vmatpush1.bf16.xpose.msra.mxu0 0
        %1120 = vmatprep.subr.bf16.mxu0 0
        %1121 = vmatpush1.bf16.xpose.msra.mxu0 0
        %1122 = vmatprep.subr.bf16.mxu0 0
        %1123 = vmatpush1.bf16.xpose.msra.mxu0 0
        %1124 = vmatprep.subr.bf16.mxu0 0
        %1125 = vmatpush1.bf16.xpose.msra.mxu0 0
        %1126 = vmatprep.subr.bf16.mxu0 0
        %1127 = vmatpush1.bf16.xpose.msra.mxu0 0
        %1128 = vmatprep.subr.bf16.mxu0 0
        %1129 = vmatpush1.bf16.xpose.msra.mxu0 0
        %1130 = vmatprep.subr.bf16.mxu0 0
        %1131 = vmatpush1.bf16.xpose.msra.mxu0 0
        %1132 = vmatprep.subr.bf16.mxu0 0
        %1133 = vmatpush1.bf16.xpose.msra.mxu0 0
        %1134 = vmatprep.mubr.bf16.mxu0 0
        %1135 = vmatmul.mubr.bf16.gmra.mrb[0].mxu0 %v1097
        %v1136 = vpop.f32.mrb[0].mxu0
        %v1137 = vadd.f32 %v977, %v1136
        %v1138 = vpop.f32.mrb[0].mxu0
        %v1139 = vpop.f32.mrb[0].mxu0
        %v1140 = vpop.f32.mrb[0].mxu0
        %1141 = vdwg.mxu0
        %v1142 = vsel %vm981, %v1137, -inf
        %1143 = vmax.xlane.f32.xlu0 %v1142
        %v1144 = vpop.xlane.xlu0 %1143
        %v1145 = vsub.f32 %v1137, %v1144
        %v1146 = vmul.f32 %v1145, 1.442695
        %v1147 = vpow.pop %v1146
        %v1148 = vsel %vm981, %v1147, 0.0
        %1149 = vadd.xlane.f32.xlu0 %v1148
        %v1150 = vpop.xlane.xlu0 %1149
        %v1151 = vrcp.pop %v1150
        %v1152 = vmul.f32 %v1147, %v1151
        %v1153 = vpack.c.bf16 %v1152, %v1152
        %1154 = vrot.lane.b32.xlu0 %v980, 88
        %v1155 = vpop.permute.xlu0 %1154
        %v1157 = vsel %vm981, %v1153, 0
        %v1160 = vsel %vm1046, %v1155, 0
        %1162 = vmatprep.subr.bf16.mxu0 0
        %1163 = vmatpush1.bf16.msra.mxu0 %v1160
        %1164 = vmatprep.subr.bf16.mxu0 0
        %1165 = vmatpush1.bf16.msra.mxu0 0
        %1166 = vmatprep.subr.bf16.mxu0 0
        %1167 = vmatpush1.bf16.msra.mxu0 0
        %1168 = vmatprep.subr.bf16.mxu0 0
        %1169 = vmatpush1.bf16.msra.mxu0 0
        %1170 = vmatprep.subr.bf16.mxu0 0
        %1171 = vmatpush1.bf16.msra.mxu0 0
        %1172 = vmatprep.subr.bf16.mxu0 0
        %1173 = vmatpush1.bf16.msra.mxu0 0
        %1174 = vmatprep.subr.bf16.mxu0 0
        %1175 = vmatpush1.bf16.msra.mxu0 0
        %1176 = vmatprep.subr.bf16.mxu0 0
        %1177 = vmatpush1.bf16.msra.mxu0 0
        %1178 = vmatprep.subr.bf16.mxu0 0
        %1179 = vmatpush1.bf16.msra.mxu0 0
        %1180 = vmatprep.subr.bf16.mxu0 0
        %1181 = vmatpush1.bf16.msra.mxu0 0
        %1182 = vmatprep.subr.bf16.mxu0 0
        %1183 = vmatpush1.bf16.msra.mxu0 0
        %1184 = vmatprep.subr.bf16.mxu0 0
        %1185 = vmatpush1.bf16.msra.mxu0 0
        %1186 = vmatprep.subr.bf16.mxu0 0
        %1187 = vmatpush1.bf16.msra.mxu0 0
        %1188 = vmatprep.subr.bf16.mxu0 0
        %1189 = vmatpush1.bf16.msra.mxu0 0
        %1190 = vmatprep.subr.bf16.mxu0 0
        %1191 = vmatpush1.bf16.msra.mxu0 0
        %1192 = vmatprep.subr.bf16.mxu0 0
        %1193 = vmatpush1.bf16.msra.mxu0 0
        %1194 = vmatprep.mubr.bf16.mxu0 0
        %1195 = vmatmul.mubr.bf16.gmra.mrb[0].mxu0 %v1157
        %v1196 = vpop.f32.mrb[0].mxu0
        %v1197 = vadd.f32 0.0, %v1196
        %v1198 = vpop.f32.mrb[0].mxu0
        %v1199 = vpop.f32.mrb[0].mxu0
        %v1200 = vpop.f32.mrb[0].mxu0
        %1201 = vdwg.mxu0
        %1203 = vrot.lane.b32.xlu0 %v1197, 8
        %v1204 = vpop.permute.xlu0 %1203
        %vm1206 = vcmask 130112
        %1207 = vst.msk [vmem:[#allocation2] sm:$0xff] %vm1206, %v1204
        %1208 = vrot.lane.b32.xlu0 %v979, 112
        %v1209 = vpop.permute.xlu0 %1208
        %1210 = vrot.lane.b32.xlu0 %v980, 112
        %v1211 = vpop.permute.xlu0 %1210
        %v1213 = vsel %vm981, %v1209, 0
        %v1216 = vsel %vm981, %v1211, 0
        %1218 = vmatprep.subr.bf16.mxu0 0
        %1219 = vmatpush1.bf16.xpose.msra.mxu0 %v1216
        %1220 = vmatprep.subr.bf16.mxu0 0
        %1221 = vmatpush1.bf16.xpose.msra.mxu0 0
        %1222 = vmatprep.subr.bf16.mxu0 0
        %1223 = vmatpush1.bf16.xpose.msra.mxu0 0
        %1224 = vmatprep.subr.bf16.mxu0 0
        %1225 = vmatpush1.bf16.xpose.msra.mxu0 0
        %1226 = vmatprep.subr.bf16.mxu0 0
        %1227 = vmatpush1.bf16.xpose.msra.mxu0 0
        %1228 = vmatprep.subr.bf16.mxu0 0
        %1229 = vmatpush1.bf16.xpose.msra.mxu0 0
        %1230 = vmatprep.subr.bf16.mxu0 0
        %1231 = vmatpush1.bf16.xpose.msra.mxu0 0
        %1232 = vmatprep.subr.bf16.mxu0 0
        %1233 = vmatpush1.bf16.xpose.msra.mxu0 0
        %1234 = vmatprep.subr.bf16.mxu0 0
        %1235 = vmatpush1.bf16.xpose.msra.mxu0 0
        %1236 = vmatprep.subr.bf16.mxu0 0
        %1237 = vmatpush1.bf16.xpose.msra.mxu0 0
        %1238 = vmatprep.subr.bf16.mxu0 0
        %1239 = vmatpush1.bf16.xpose.msra.mxu0 0
        %1240 = vmatprep.subr.bf16.mxu0 0
        %1241 = vmatpush1.bf16.xpose.msra.mxu0 0
        %1242 = vmatprep.subr.bf16.mxu0 0
        %1243 = vmatpush1.bf16.xpose.msra.mxu0 0
        %1244 = vmatprep.subr.bf16.mxu0 0
        %1245 = vmatpush1.bf16.xpose.msra.mxu0 0
        %1246 = vmatprep.subr.bf16.mxu0 0
        %1247 = vmatpush1.bf16.xpose.msra.mxu0 0
        %1248 = vmatprep.subr.bf16.mxu0 0
        %1249 = vmatpush1.bf16.xpose.msra.mxu0 0
        %1250 = vmatprep.mubr.bf16.mxu0 0
        %1251 = vmatmul.mubr.bf16.gmra.mrb[0].mxu0 %v1213
        %v1252 = vpop.f32.mrb[0].mxu0
        %v1253 = vadd.f32 %v977, %v1252
        %v1254 = vpop.f32.mrb[0].mxu0
        %v1255 = vpop.f32.mrb[0].mxu0
        %v1256 = vpop.f32.mrb[0].mxu0
        %1257 = vdwg.mxu0
        %v1258 = vsel %vm981, %v1253, -inf
        %1259 = vmax.xlane.f32.xlu0 %v1258
        %v1260 = vpop.xlane.xlu0 %1259
        %v1261 = vsub.f32 %v1253, %v1260
        %v1262 = vmul.f32 %v1261, 1.442695
        %v1263 = vpow.pop %v1262
        %v1264 = vsel %vm981, %v1263, 0.0
        %1265 = vadd.xlane.f32.xlu0 %v1264
        %v1266 = vpop.xlane.xlu0 %1265
        %v1267 = vrcp.pop %v1266
        %v1268 = vmul.f32 %v1263, %v1267
        %v1269 = vpack.c.bf16 %v1268, %v1268
        %1270 = vrot.lane.b32.xlu0 %v980, 80
        %v1271 = vpop.permute.xlu0 %1270
        %v1273 = vsel %vm981, %v1269, 0
        %v1276 = vsel %vm1046, %v1271, 0
        %1278 = vmatprep.subr.bf16.mxu0 0
        %1279 = vmatpush1.bf16.msra.mxu0 %v1276
        %1280 = vmatprep.subr.bf16.mxu0 0
        %1281 = vmatpush1.bf16.msra.mxu0 0
        %1282 = vmatprep.subr.bf16.mxu0 0
        %1283 = vmatpush1.bf16.msra.mxu0 0
        %1284 = vmatprep.subr.bf16.mxu0 0
        %1285 = vmatpush1.bf16.msra.mxu0 0
        %1286 = vmatprep.subr.bf16.mxu0 0
        %1287 = vmatpush1.bf16.msra.mxu0 0
        %1288 = vmatprep.subr.bf16.mxu0 0
        %1289 = vmatpush1.bf16.msra.mxu0 0
        %1290 = vmatprep.subr.bf16.mxu0 0
        %1291 = vmatpush1.bf16.msra.mxu0 0
        %1292 = vmatprep.subr.bf16.mxu0 0
        %1293 = vmatpush1.bf16.msra.mxu0 0
        %1294 = vmatprep.subr.bf16.mxu0 0
        %1295 = vmatpush1.bf16.msra.mxu0 0
        %1296 = vmatprep.subr.bf16.mxu0 0
        %1297 = vmatpush1.bf16.msra.mxu0 0
        %1298 = vmatprep.subr.bf16.mxu0 0
        %1299 = vmatpush1.bf16.msra.mxu0 0
        %1300 = vmatprep.subr.bf16.mxu0 0
        %1301 = vmatpush1.bf16.msra.mxu0 0
        %1302 = vmatprep.subr.bf16.mxu0 0
        %1303 = vmatpush1.bf16.msra.mxu0 0
        %1304 = vmatprep.subr.bf16.mxu0 0
        %1305 = vmatpush1.bf16.msra.mxu0 0
        %1306 = vmatprep.subr.bf16.mxu0 0
        %1307 = vmatpush1.bf16.msra.mxu0 0
        %1308 = vmatprep.subr.bf16.mxu0 0
        %1309 = vmatpush1.bf16.msra.mxu0 0
        %1310 = vmatprep.mubr.bf16.mxu0 0
        %1311 = vmatmul.mubr.bf16.gmra.mrb[0].mxu0 %v1273
        %v1312 = vpop.f32.mrb[0].mxu0
        %v1313 = vadd.f32 0.0, %v1312
        %v1314 = vpop.f32.mrb[0].mxu0
        %v1315 = vpop.f32.mrb[0].mxu0
        %v1316 = vpop.f32.mrb[0].mxu0
        %1317 = vdwg.mxu0
        %1319 = vrot.lane.b32.xlu0 %v1313, 16
        %v1320 = vpop.permute.xlu0 %1319
        %vm1322 = vcmask 195712
        %1323 = vst.msk [vmem:[#allocation2] sm:$0xff] %vm1322, %v1320
        %1324 = vrot.lane.b32.xlu0 %v979, 104
        %v1325 = vpop.permute.xlu0 %1324
        %1326 = vrot.lane.b32.xlu0 %v980, 104
        %v1327 = vpop.permute.xlu0 %1326
        %v1329 = vsel %vm981, %v1325, 0
        %v1332 = vsel %vm981, %v1327, 0
        %1334 = vmatprep.subr.bf16.mxu0 0
        %1335 = vmatpush1.bf16.xpose.msra.mxu0 %v1332
        %1336 = vmatprep.subr.bf16.mxu0 0
        %1337 = vmatpush1.bf16.xpose.msra.mxu0 0
        %1338 = vmatprep.subr.bf16.mxu0 0
        %1339 = vmatpush1.bf16.xpose.msra.mxu0 0
        %1340 = vmatprep.subr.bf16.mxu0 0
        %1341 = vmatpush1.bf16.xpose.msra.mxu0 0
        %1342 = vmatprep.subr.bf16.mxu0 0
        %1343 = vmatpush1.bf16.xpose.msra.mxu0 0
        %1344 = vmatprep.subr.bf16.mxu0 0
        %1345 = vmatpush1.bf16.xpose.msra.mxu0 0
        %1346 = vmatprep.subr.bf16.mxu0 0
        %1347 = vmatpush1.bf16.xpose.msra.mxu0 0
        %1348 = vmatprep.subr.bf16.mxu0 0
        %1349 = vmatpush1.bf16.xpose.msra.mxu0 0
        %1350 = vmatprep.subr.bf16.mxu0 0
        %1351 = vmatpush1.bf16.xpose.msra.mxu0 0
        %1352 = vmatprep.subr.bf16.mxu0 0
        %1353 = vmatpush1.bf16.xpose.msra.mxu0 0
        %1354 = vmatprep.subr.bf16.mxu0 0
        %1355 = vmatpush1.bf16.xpose.msra.mxu0 0
        %1356 = vmatprep.subr.bf16.mxu0 0
        %1357 = vmatpush1.bf16.xpose.msra.mxu0 0
        %1358 = vmatprep.subr.bf16.mxu0 0
        %1359 = vmatpush1.bf16.xpose.msra.mxu0 0
        %1360 = vmatprep.subr.bf16.mxu0 0
        %1361 = vmatpush1.bf16.xpose.msra.mxu0 0
        %1362 = vmatprep.subr.bf16.mxu0 0
        %1363 = vmatpush1.bf16.xpose.msra.mxu0 0
        %1364 = vmatprep.subr.bf16.mxu0 0
        %1365 = vmatpush1.bf16.xpose.msra.mxu0 0
        %1366 = vmatprep.mubr.bf16.mxu0 0
        %1367 = vmatmul.mubr.bf16.gmra.mrb[0].mxu0 %v1329
        %v1368 = vpop.f32.mrb[0].mxu0
        %v1369 = vadd.f32 %v977, %v1368
        %v1370 = vpop.f32.mrb[0].mxu0
        %v1371 = vpop.f32.mrb[0].mxu0
        %v1372 = vpop.f32.mrb[0].mxu0
        %1373 = vdwg.mxu0
        %v1374 = vsel %vm981, %v1369, -inf
        %1375 = vmax.xlane.f32.xlu0 %v1374
        %v1376 = vpop.xlane.xlu0 %1375
        %v1377 = vsub.f32 %v1369, %v1376
        %v1378 = vmul.f32 %v1377, 1.442695
        %v1379 = vpow.pop %v1378
        %v1380 = vsel %vm981, %v1379, 0.0
        %1381 = vadd.xlane.f32.xlu0 %v1380
        %v1382 = vpop.xlane.xlu0 %1381
        %v1383 = vrcp.pop %v1382
        %v1384 = vmul.f32 %v1379, %v1383
        %v1385 = vpack.c.bf16 %v1384, %v1384
        %1386 = vrot.lane.b32.xlu0 %v980, 72
        %v1387 = vpop.permute.xlu0 %1386
        %v1389 = vsel %vm981, %v1385, 0
        %v1392 = vsel %vm1046, %v1387, 0
        %1394 = vmatprep.subr.bf16.mxu0 0
        %1395 = vmatpush1.bf16.msra.mxu0 %v1392
        %1396 = vmatprep.subr.bf16.mxu0 0
        %1397 = vmatpush1.bf16.msra.mxu0 0
        %1398 = vmatprep.subr.bf16.mxu0 0
        %1399 = vmatpush1.bf16.msra.mxu0 0
        %1400 = vmatprep.subr.bf16.mxu0 0
        %1401 = vmatpush1.bf16.msra.mxu0 0
        %1402 = vmatprep.subr.bf16.mxu0 0
        %1403 = vmatpush1.bf16.msra.mxu0 0
        %1404 = vmatprep.subr.bf16.mxu0 0
        %1405 = vmatpush1.bf16.msra.mxu0 0
        %1406 = vmatprep.subr.bf16.mxu0 0
        %1407 = vmatpush1.bf16.msra.mxu0 0
        %1408 = vmatprep.subr.bf16.mxu0 0
        %1409 = vmatpush1.bf16.msra.mxu0 0
        %1410 = vmatprep.subr.bf16.mxu0 0
        %1411 = vmatpush1.bf16.msra.mxu0 0
        %1412 = vmatprep.subr.bf16.mxu0 0
        %1413 = vmatpush1.bf16.msra.mxu0 0
        %1414 = vmatprep.subr.bf16.mxu0 0
        %1415 = vmatpush1.bf16.msra.mxu0 0
        %1416 = vmatprep.subr.bf16.mxu0 0
        %1417 = vmatpush1.bf16.msra.mxu0 0
        %1418 = vmatprep.subr.bf16.mxu0 0
        %1419 = vmatpush1.bf16.msra.mxu0 0
        %1420 = vmatprep.subr.bf16.mxu0 0
        %1421 = vmatpush1.bf16.msra.mxu0 0
        %1422 = vmatprep.subr.bf16.mxu0 0
        %1423 = vmatpush1.bf16.msra.mxu0 0
        %1424 = vmatprep.subr.bf16.mxu0 0
        %1425 = vmatpush1.bf16.msra.mxu0 0
        %1426 = vmatprep.mubr.bf16.mxu0 0
        %1427 = vmatmul.mubr.bf16.gmra.mrb[0].mxu0 %v1389
        %v1428 = vpop.f32.mrb[0].mxu0
        %v1429 = vadd.f32 0.0, %v1428
        %v1430 = vpop.f32.mrb[0].mxu0
        %v1431 = vpop.f32.mrb[0].mxu0
        %v1432 = vpop.f32.mrb[0].mxu0
        %1433 = vdwg.mxu0
        %1435 = vrot.lane.b32.xlu0 %v1429, 24
        %v1436 = vpop.permute.xlu0 %1435
        %vm1438 = vcmask 261312
        %1439 = vst.msk [vmem:[#allocation2] sm:$0xff] %vm1438, %v1436
        %v1440 = vld [vmem:[#allocation2] sm:$0xff]
        %v1441 = vpack.c.bf16 %v1440, %v1440
        %v1442 = vld [vmem:[#allocation15] sm:$0xf]
        %v1443 = vld [vmem:[#allocation15 + $0x4] sm:$0xf]
        %v1444 = vld [vmem:[#allocation15 + $0x8] sm:$0xf]
        %v1445 = vld [vmem:[#allocation15 + $0xc] sm:$0xf]
        %v1450 = vunpack.c.l.b16 %v1442
        %v1451 = vunpack.c.l.b16 %v1443
        %v1452 = vunpack.c.l.b16 %v1444
        %v1453 = vunpack.c.l.b16 %v1445
        %v1454 = vpack.c.b16 %v1451, %v1450
        %v1455 = vpack.c.b16 %v1453, %v1452
        %v1459 = vsel %vm860, %v1441, 0
        %1461 = vmatprep.subr.bf16.mxu0 0
        %1462 = vmatpush1.bf16.msra.mxu0 %v1454
        %1463 = vmatprep.subr.bf16.mxu0 0
        %1464 = vmatpush1.bf16.msra.mxu0 %v1455
        %1465 = vmatprep.subr.bf16.mxu0 0
        %1466 = vmatpush1.bf16.msra.mxu0 0
        %1467 = vmatprep.subr.bf16.mxu0 0
        %1468 = vmatpush1.bf16.msra.mxu0 0
        %1469 = vmatprep.subr.bf16.mxu0 0
        %1470 = vmatpush1.bf16.msra.mxu0 0
        %1471 = vmatprep.subr.bf16.mxu0 0
        %1472 = vmatpush1.bf16.msra.mxu0 0
        %1473 = vmatprep.subr.bf16.mxu0 0
        %1474 = vmatpush1.bf16.msra.mxu0 0
        %1475 = vmatprep.subr.bf16.mxu0 0
        %1476 = vmatpush1.bf16.msra.mxu0 0
        %1477 = vmatprep.subr.bf16.mxu0 0
        %1478 = vmatpush1.bf16.msra.mxu0 0
        %1479 = vmatprep.subr.bf16.mxu0 0
        %1480 = vmatpush1.bf16.msra.mxu0 0
        %1481 = vmatprep.subr.bf16.mxu0 0
        %1482 = vmatpush1.bf16.msra.mxu0 0
        %1483 = vmatprep.subr.bf16.mxu0 0
        %1484 = vmatpush1.bf16.msra.mxu0 0
        %1485 = vmatprep.subr.bf16.mxu0 0
        %1486 = vmatpush1.bf16.msra.mxu0 0
        %1487 = vmatprep.subr.bf16.mxu0 0
        %1488 = vmatpush1.bf16.msra.mxu0 0
        %1489 = vmatprep.subr.bf16.mxu0 0
        %1490 = vmatpush1.bf16.msra.mxu0 0
        %1491 = vmatprep.subr.bf16.mxu0 0
        %1492 = vmatpush1.bf16.msra.mxu0 0
        %1493 = vmatprep.mubr.bf16.mxu0 0
        %1494 = vmatmul.mubr.bf16.gmra.mrb[0].mxu0 %v1459
        %v1495 = vpop.f32.mrb[0].mxu0
        %v1496 = vadd.f32 0.0, %v1495
        %v1497 = vpop.f32.mrb[0].mxu0
        %v1498 = vpop.f32.mrb[0].mxu0
        %v1499 = vpop.f32.mrb[0].mxu0
        %1500 = vdwg.mxu0
        %v1501 = vld [vmem:[#allocation17] sm:$0x1]
        %v1502 = vld [vmem:[#allocation18] sm:$0x1]
        %v1503 = vld [vmem:[#allocation20] sm:$0x1]
        %v1504 = vld [vmem:[#allocation21] sm:$0xf]
        %v1505 = vld [vmem:[#allocation21 + $0x4] sm:$0xf]
        %v1506 = vld [vmem:[#allocation21 + $0x8] sm:$0xf]
        %v1507 = vld [vmem:[#allocation21 + $0xc] sm:$0xf]
        %v1508 = vld [vmem:[#allocation23] sm:$0x1]
        %v1509 = vld [vmem:[#allocation24] sm:$0xf]
        %v1510 = vld [vmem:[#allocation24 + $0x4] sm:$0xf]
        %v1511 = vld [vmem:[#allocation24 + $0x8] sm:$0xf]
        %v1512 = vld [vmem:[#allocation24 + $0xc] sm:$0xf]
        %v1513 = vld [vmem:[#allocation24 + $0x10] sm:$0xf]
        %v1514 = vld [vmem:[#allocation24 + $0x14] sm:$0xf]
        %v1515 = vld [vmem:[#allocation24 + $0x18] sm:$0xf]
        %v1516 = vld [vmem:[#allocation24 + $0x1c] sm:$0xf]
        %v1517 = vld [vmem:[#allocation24 + $0x20] sm:$0xf]
        %v1518 = vld [vmem:[#allocation24 + $0x24] sm:$0xf]
        %v1519 = vld [vmem:[#allocation24 + $0x28] sm:$0xf]
        %v1520 = vld [vmem:[#allocation24 + $0x2c] sm:$0xf]
        %v1521 = vld [vmem:[#allocation24 + $0x30] sm:$0xf]
        %v1522 = vld [vmem:[#allocation24 + $0x34] sm:$0xf]
        %v1523 = vld [vmem:[#allocation24 + $0x38] sm:$0xf]
        %v1524 = vld [vmem:[#allocation24 + $0x3c] sm:$0xf]
        %v1525 = vld [vmem:[#allocation26] sm:$0x1]
        %v1526 = vld [vmem:[#allocation27] sm:$0x1]
        %v1527 = vld [vmem:[#allocation29] sm:$0x1]
        %v1528 = vadd.f32 %v835, %v1496
        %v1530 = vlaneseq
        %v1531 = vshrl.u32 %v1530, 7
        %v1532 = vsub.s32 0, %v1531
        %v1533 = vrot.slane %v1501, %v1532
        %v1535 = vadd.f32 %v1528, %v1533
        %v1536 = vsel %vm860, %v1535, 0.0
        %1537 = vadd.xlane.f32.xlu0 %v1536
        %v1538 = vpop.xlane.xlu0 %1537
        %v1539 = vrcp.pop 32.0
        %v1540 = vmul.f32 %v1538, %v1539
        %v1541 = vsub.f32 %v1535, %v1540
        %v1542 = vmul.f32 %v1541, %v1541
        %v1543 = vsel %vm860, %v1542, 0.0
        %1544 = vadd.xlane.f32.xlu0 %v1543
        %v1545 = vpop.xlane.xlu0 %1544
        %v1546 = vmul.f32 %v1545, %v1539
        %v1547 = vadd.f32 %v1546, 1e-05
        %v1548 = vrsqrt.pop %v1547
        %v1549 = vmul.f32 %v1541, %v1548
        %v1551 = vlaneseq
        %v1552 = vshrl.u32 %v1551, 7
        %v1553 = vsub.s32 0, %v1552
        %v1554 = vrot.slane %v1502, %v1553
        %v1556 = vmul.f32 %v1549, %v1554
        %v1558 = vlaneseq
        %v1559 = vshrl.u32 %v1558, 7
        %v1560 = vsub.s32 0, %v1559
        %v1561 = vrot.slane %v1503, %v1560
        %v1563 = vadd.f32 %v1556, %v1561
        %v1564 = vpack.c.bf16 %v1563, %v1563
        %v1566 = vlaneseq
        %v1567 = vshrl.u32 %v1566, 7
        %v1568 = vsub.s32 0, %v1567
        %v1569 = vrot.slane %v1508, %v1568
        %v1575 = vunpack.c.l.b16 %v1504
        %v1576 = vunpack.c.l.b16 %v1505
        %v1577 = vunpack.c.l.b16 %v1506
        %v1578 = vunpack.c.l.b16 %v1507
        %v1579 = vpack.c.b16 %v1576, %v1575
        %v1580 = vpack.c.b16 %v1578, %v1577
        %v1584 = vsel %vm860, %v1564, 0
        %1586 = vmatprep.subr.bf16.mxu0 0
        %1587 = vmatpush1.bf16.msra.mxu0 %v1579
        %1588 = vmatprep.subr.bf16.mxu0 0
        %1589 = vmatpush1.bf16.msra.mxu0 %v1580
        %1590 = vmatprep.subr.bf16.mxu0 0
        %1591 = vmatpush1.bf16.msra.mxu0 0
        %1592 = vmatprep.subr.bf16.mxu0 0
        %1593 = vmatpush1.bf16.msra.mxu0 0
        %1594 = vmatprep.subr.bf16.mxu0 0
        %1595 = vmatpush1.bf16.msra.mxu0 0
        %1596 = vmatprep.subr.bf16.mxu0 0
        %1597 = vmatpush1.bf16.msra.mxu0 0
        %1598 = vmatprep.subr.bf16.mxu0 0
        %1599 = vmatpush1.bf16.msra.mxu0 0
        %1600 = vmatprep.subr.bf16.mxu0 0
        %1601 = vmatpush1.bf16.msra.mxu0 0
        %1602 = vmatprep.subr.bf16.mxu0 0
        %1603 = vmatpush1.bf16.msra.mxu0 0
        %1604 = vmatprep.subr.bf16.mxu0 0
        %1605 = vmatpush1.bf16.msra.mxu0 0
        %1606 = vmatprep.subr.bf16.mxu0 0
        %1607 = vmatpush1.bf16.msra.mxu0 0
        %1608 = vmatprep.subr.bf16.mxu0 0
        %1609 = vmatpush1.bf16.msra.mxu0 0
        %1610 = vmatprep.subr.bf16.mxu0 0
        %1611 = vmatpush1.bf16.msra.mxu0 0
        %1612 = vmatprep.subr.bf16.mxu0 0
        %1613 = vmatpush1.bf16.msra.mxu0 0
        %1614 = vmatprep.subr.bf16.mxu0 0
        %1615 = vmatpush1.bf16.msra.mxu0 0
        %1616 = vmatprep.subr.bf16.mxu0 0
        %1617 = vmatpush1.bf16.msra.mxu0 0
        %1618 = vmatprep.mubr.bf16.mxu0 0
        %1619 = vmatmul.mubr.bf16.gmra.mrb[0].mxu0 %v1584
        %v1620 = vpop.f32.mrb[0].mxu0
        %v1621 = vadd.f32 %v1569, %v1620
        %v1622 = vpop.f32.mrb[0].mxu0
        %v1623 = vpop.f32.mrb[0].mxu0
        %v1624 = vpop.f32.mrb[0].mxu0
        %1625 = vdwg.mxu0
        %v1626 = vmax.f32 %v1621, 0.0
        %v1627 = vpack.c.bf16 %v1626, %v1626
        %v1629 = vlaneseq
        %v1630 = vshrl.u32 %v1629, 7
        %v1631 = vsub.s32 0, %v1630
        %v1632 = vrot.slane %v1525, %v1631
        %v1650 = vunpack.c.l.b16 %v1509
        %v1651 = vunpack.c.l.b16 %v1510
        %v1652 = vunpack.c.l.b16 %v1511
        %v1653 = vunpack.c.l.b16 %v1512
        %v1654 = vunpack.c.l.b16 %v1513
        %v1655 = vunpack.c.l.b16 %v1514
        %v1656 = vunpack.c.l.b16 %v1515
        %v1657 = vunpack.c.l.b16 %v1516
        %v1658 = vunpack.c.l.b16 %v1517
        %v1659 = vunpack.c.l.b16 %v1518
        %v1660 = vunpack.c.l.b16 %v1519
        %v1661 = vunpack.c.l.b16 %v1520
        %v1662 = vunpack.c.l.b16 %v1521
        %v1663 = vunpack.c.l.b16 %v1522
        %v1664 = vunpack.c.l.b16 %v1523
        %v1665 = vunpack.c.l.b16 %v1524
        %v1666 = vpack.c.b16 %v1651, %v1650
        %v1667 = vpack.c.b16 %v1653, %v1652
        %v1668 = vpack.c.b16 %v1655, %v1654
        %v1669 = vpack.c.b16 %v1657, %v1656
        %v1670 = vpack.c.b16 %v1659, %v1658
        %v1671 = vpack.c.b16 %v1661, %v1660
        %v1672 = vpack.c.b16 %v1663, %v1662
        %v1673 = vpack.c.b16 %v1665, %v1664
        %1682 = vmatprep.subr.bf16.mxu0 0
        %1683 = vmatpush1.bf16.msra.mxu0 %v1666
        %1684 = vmatprep.subr.bf16.mxu0 0
        %1685 = vmatpush1.bf16.msra.mxu0 %v1667
        %1686 = vmatprep.subr.bf16.mxu0 0
        %1687 = vmatpush1.bf16.msra.mxu0 %v1668
        %1688 = vmatprep.subr.bf16.mxu0 0
        %1689 = vmatpush1.bf16.msra.mxu0 %v1669
        %1690 = vmatprep.subr.bf16.mxu0 0
        %1691 = vmatpush1.bf16.msra.mxu0 %v1670
        %1692 = vmatprep.subr.bf16.mxu0 0
        %1693 = vmatpush1.bf16.msra.mxu0 %v1671
        %1694 = vmatprep.subr.bf16.mxu0 0
        %1695 = vmatpush1.bf16.msra.mxu0 %v1672
        %1696 = vmatprep.subr.bf16.mxu0 0
        %1697 = vmatpush1.bf16.msra.mxu0 %v1673
        %1698 = vmatprep.subr.bf16.mxu0 0
        %1699 = vmatpush1.bf16.msra.mxu0 0
        %1700 = vmatprep.subr.bf16.mxu0 0
        %1701 = vmatpush1.bf16.msra.mxu0 0
        %1702 = vmatprep.subr.bf16.mxu0 0
        %1703 = vmatpush1.bf16.msra.mxu0 0
        %1704 = vmatprep.subr.bf16.mxu0 0
        %1705 = vmatpush1.bf16.msra.mxu0 0
        %1706 = vmatprep.subr.bf16.mxu0 0
        %1707 = vmatpush1.bf16.msra.mxu0 0
        %1708 = vmatprep.subr.bf16.mxu0 0
        %1709 = vmatpush1.bf16.msra.mxu0 0
        %1710 = vmatprep.subr.bf16.mxu0 0
        %1711 = vmatpush1.bf16.msra.mxu0 0
        %1712 = vmatprep.subr.bf16.mxu0 0
        %1713 = vmatpush1.bf16.msra.mxu0 0
        %1714 = vmatprep.mubr.bf16.mxu0 0
        %1715 = vmatmul.mubr.bf16.gmra.mrb[0].mxu0 %v1627
        %v1716 = vpop.f32.mrb[0].mxu0
        %v1717 = vadd.f32 %v1632, %v1716
        %v1718 = vpop.f32.mrb[0].mxu0
        %v1719 = vpop.f32.mrb[0].mxu0
        %v1720 = vpop.f32.mrb[0].mxu0
        %1721 = vdwg.mxu0
        %v1722 = vadd.f32 %v1563, %v1717
        %v1723 = vsel %vm860, %v1722, 0.0
        %1724 = vadd.xlane.f32.xlu0 %v1723
        %v1725 = vpop.xlane.xlu0 %1724
        %v1726 = vmul.f32 %v1725, %v1539
        %v1727 = vsub.f32 %v1722, %v1726
        %v1728 = vmul.f32 %v1727, %v1727
        %v1729 = vsel %vm860, %v1728, 0.0
        %1730 = vadd.xlane.f32.xlu0 %v1729
        %v1731 = vpop.xlane.xlu0 %1730
        %v1732 = vmul.f32 %v1731, %v1539
        %v1733 = vadd.f32 %v1732, 1e-05
        %v1734 = vrsqrt.pop %v1733
        %v1735 = vmul.f32 %v1727, %v1734
        %v1737 = vlaneseq
        %v1738 = vshrl.u32 %v1737, 7
        %v1739 = vsub.s32 0, %v1738
        %v1740 = vrot.slane %v1526, %v1739
        %v1742 = vmul.f32 %v1735, %v1740
        %v1744 = vlaneseq
        %v1745 = vshrl.u32 %v1744, 7
        %v1746 = vsub.s32 0, %v1745
        %v1747 = vrot.slane %v1527, %v1746
        %v1749 = vadd.f32 %v1742, %v1747
        %1750 = vst.msk [vmem:[%s833] sm:$0xff] %vm860, %v1749
        %s1751 = sand.u32 %s440, 1
        %s1752 = scalar_lea.sflag [#allocation5], %s1751
        %s1753 = sand.u32 %s440, 1
        %s1754 = smul.addr %s1753, 8
        %s1755 = scalar_lea.vmem [#allocation30], %s1754
        // Predicated region
        $region157: #{tpu_custom_call.1} parent=87 // pred_check
          %p1756 = pneg %p450
        $region158: #{tpu_custom_call.1} parent=87 // pred_check_branch
          %1758 = sbr.rel (%p1756) target = $region160
        $region159: #{tpu_custom_call.1} parent=87 // pred_region
          %s1760 = ssub.s32 128, 128
          %1761 = vsyncadd %s1752, %s1760
          %s1762 = sadd.s32 %s49, %s48
          %s1763 = smul.addr %s1762, 128
          %s1764 = scalar_lea.hbm %s17, %s1763
          %s1766 = sshll.u32 %s1755, 4
          %s1767 = int_to_ptr.vmem [resolvable:$true] %s1766
          %1769 = dma.vmem_to_hbm [thread:$0]  %s1767, 128, %s1764, %s1752
        $region160: #{tpu_custom_call.1} parent=87 // pred_fallthru
          _
      $region88: #{tpu_custom_call.1} parent=5 // pred_fallthru
        _
      %p1770 = scmp.le.s32.totalorder 2, %s39
      // Predicated region
      $region161: #{tpu_custom_call.1} parent=5 // pred_check
        %p1771 = pneg %p1770
      $region162: #{tpu_custom_call.1} parent=5 // pred_check_branch
        %1773 = sbr.rel (%p1771) target = $region164
      $region163: #{tpu_custom_call.1} parent=5 // pred_region
        %s1774 = ssub.s32 %s39, 2
        // Predicated region
        $region165: #{tpu_custom_call.1} parent=163 // pred_check
          %p1775 = pneg %p456
        $region166: #{tpu_custom_call.1} parent=163 // pred_check_branch
          %1777 = sbr.rel (%p1775) target = $region168
        $region167: #{tpu_custom_call.1} parent=163 // pred_region
          %s1778 = sand.u32 %s441, 1
          %s1779 = scalar_lea.sflag [#allocation5], %s1778
          %s1780 = sand.u32 %s441, 1
          %s1781 = smul.addr %s1780, 8
          %s1782 = scalar_lea.vmem [#allocation30], %s1781
          %1783 = dma.done %s1779, 128
        $region168: #{tpu_custom_call.1} parent=163 // pred_fallthru
          _
      $region164: #{tpu_custom_call.1} parent=5 // pred_fallthru
        _
    $region6: #{tpu_custom_call.1} parent=1 // loop_footer
      %s43 = sadd.s32 1, %s39
    $region7: #{tpu_custom_call.1} parent=1 // loop_footer_branch
      %38 = sbr.rel target = $region3
    $region8: #{tpu_custom_call.1} parent=1 // loop_exit
      _
    %1784 = vsyncpa [#allocation4], 1
    %s1785 = scalar_lea.sflag [#allocation4], 1
    %1786 = vsyncpa %s1785, 1
    %1787 = vsyncpa [#allocation7], 1
    %s1788 = scalar_lea.sflag [#allocation7], 1
    %1789 = vsyncpa %s1788, 1
    %1790 = vsyncpa [#allocation10], 1
    %1791 = vsyncpa [#allocation13], 1
    %1792 = vsyncpa [#allocation16], 1
    %1793 = vsyncpa [#allocation19], 1
    %1794 = vsyncpa [#allocation22], 1
    %1795 = vsyncpa [#allocation25], 1
    %1796 = vsyncpa [#allocation28], 1
    %1797 = vsyncpa [#allocation5], 1
    %s1798 = scalar_lea.sflag [#allocation5], 1
    %1799 = vsyncpa %s1798, 1

</llo_original>
